<compile_context>
chip_gen: v6e
topology: v6e:2x2x1
jax: 0.10.0
libtpu: 0.0.40
codegen_flags: <defaults>
</compile_context>

<pallas_src>
import jax
import jax.numpy as jnp
import numpy as np
from jax.experimental import pallas as pl
from jax.experimental.pallas import tpu as pltpu


# ----------------------------------------------------------------------------
# Fused Pallas kernel (whole layer stack, one batch element per grid step)
# ----------------------------------------------------------------------------
def _make_fused_kernel(*, layer_cfg, T, C, leak, use_cond, pad_off):
    """layer_cfg: list of (kernel_size, dilation) per ConvGLU block."""
    n_layers = len(layer_cfg)
    per = 4 if use_cond else 2   # refs per layer: w, b [, cw, cb]

    def kernel(*refs):
        refs = list(refs)
        x_ref = refs.pop(0)                                   # (1, T, C) bf16
        cond_ref = refs.pop(0) if use_cond else None          # (1, T, E) bf16
        pre_w, pre_b = refs.pop(0), refs.pop(0)
        layer_refs = [tuple(refs[i * per:(i + 1) * per]) for i in range(n_layers)]
        del refs[:n_layers * per]
        proj_w, proj_b = refs.pop(0), refs.pop(0)
        o_ref = refs.pop(0)                                   # (1, T, C) f32
        padbuf = refs.pop(0)                                  # VMEM scratch (f32)

        f32, bf16 = jnp.float32, jnp.bfloat16

        # --- preconv: Conv1d(C,C,1) + LeakyReLU (Dropout = identity in eval) ---
        y = (jnp.dot(x_ref[0], pre_w[...], preferred_element_type=f32)
             + pre_b[...].astype(f32))
        x = jnp.where(y >= 0, y, leak * y)                    # f32, stays on-chip

        if use_cond:
            cond = cond_ref[0]                                # (T, E) bf16

        if pad_off > 0:
            padbuf[...] = jnp.zeros_like(padbuf)              # zero halo once

        # --- ConvGLU stack (statically unrolled over layers) ---
        for li, (k, d) in enumerate(layer_cfg):
            if use_cond:
                w_ref, b_ref, cw_ref, cb_ref = layer_refs[li]
            else:
                w_ref, b_ref = layer_refs[li]

            if k == 1:
                lhs = x.astype(bf16)                          # (T, C)
            else:
                p = (k - 1) * d // 2
                # write interior rows (8-aligned offset); halo rows stay zero
                padbuf[pl.ds(pad_off, T), :] = x
                xp = padbuf[...]                              # (pad_off+T+p_max, C)
                taps = [xp[pad_off - p + j * d: pad_off - p + j * d + T, :]
                        for j in range(k)]
                # collapse k taps into one matmul: (T, k*C) @ (k*C, 2C)
                lhs = jnp.concatenate(taps, axis=1).astype(bf16)

            acc = (jnp.dot(lhs, w_ref[...], preferred_element_type=f32)
                   + b_ref[...].astype(f32))                  # (T, 2C)
            a, gate = acc[:, :C], acc[:, C:]
            y = x + a * jax.nn.sigmoid(gate)                  # GLU + residual

            if use_cond:
                # F.instance_norm(use_input_stats=True): per-channel over T,
                # biased variance, eps=1e-5 (all f32), then FiLM from cond.
                mean = jnp.mean(y, axis=0, keepdims=True)
                var = jnp.mean((y - mean) ** 2, axis=0, keepdims=True)
                y = (y - mean) * jax.lax.rsqrt(var + 1e-5)
                wb = (jnp.dot(cond, cw_ref[...], preferred_element_type=f32)
                      + cb_ref[...].astype(f32))              # (T, 2C)
                y = y * wb[:, :C] + wb[:, C:]
            x = y

        # --- proj: Conv1d(C,C,1) ---
        out = (jnp.dot(x.astype(bf16), proj_w[...], preferred_element_type=f32)
               + proj_b[...].astype(f32))
        o_ref[0] = out.astype(o_ref.dtype)

    return kernel


# ----------------------------------------------------------------------------
# Public wrapper: PyTorch [B, C, T] layout in / out
# ----------------------------------------------------------------------------
def frame_level_synthesizer(params, inputs, timbre, *, leak):
    """inputs: [B, C, T] f32, timbre: [B, E, T] f32 or None -> [B, C, T] f32."""
    B, C, T = inputs.shape
    x = jnp.transpose(inputs, (0, 2, 1)).astype(jnp.bfloat16)        # [B, T, C]
    use_cond = timbre is not None

    layer_cfg = [(int(g["k"]), int(g["d"])) for g in params["glus"]]
    for (k, d) in layer_cfg:
        # PyTorch padding=(k-1)*d//2 is only a symmetric 'same' pad if (k-1)*d even.
        assert (k - 1) * d % 2 == 0, "asymmetric 'same' padding not supported"
    p_max = max([(k - 1) * d // 2 for (k, d) in layer_cfg] + [0])
    pad_off = ((p_max + 7) // 8) * 8 if p_max > 0 else 0   # 8-aligned x offset
    pad_rows = max(pad_off + T + p_max, T)

    args = [x]
    in_specs = [pl.BlockSpec((1, T, C), lambda b: (b, 0, 0))]
    if use_cond:
        cond = jnp.transpose(timbre, (0, 2, 1)).astype(jnp.bfloat16)  # [B, T, E]
        E = cond.shape[-1]
        args.append(cond)
        in_specs.append(pl.BlockSpec((1, T, E), lambda b: (b, 0, 0)))

    def const_spec(a):   # weights: same block for every grid step (loaded once)
        return pl.BlockSpec(a.shape, lambda b: (0, 0))

    weights = [params["preconv_w"], params["preconv_b"]]
    for g in params["glus"]:
        k = int(g["k"])
        weights += [g["w"].reshape(k * C, 2 * C), g["b"]]
        if use_cond:
            weights += [g["cw"], g["cb"]]
    weights += [params["proj_w"], params["proj_b"]]
    args += weights
    in_specs += [const_spec(w) for w in weights]

    kernel = _make_fused_kernel(layer_cfg=layer_cfg, T=T, C=C, leak=leak,
                                use_cond=use_cond, pad_off=pad_off)
    out = pl.pallas_call(
        kernel,
        out_shape=jax.ShapeDtypeStruct((B, T, C), jnp.float32),
        grid=(B,),
        in_specs=in_specs,
        out_specs=pl.BlockSpec((1, T, C), lambda b: (b, 0, 0)),
        scratch_shapes=[pltpu.VMEM((pad_rows, C), jnp.float32)],
        compiler_params=pltpu.CompilerParams(
            dimension_semantics=("parallel",),            # batch across TCs (v7x)
            vmem_limit_bytes=32 * 1024 * 1024),
    )(*args)
    return jnp.transpose(out, (0, 2, 1))                              # [B, C, T]


# ----------------------------------------------------------------------------
# Parameter init (weights stored bf16; layout [Cin, Cout] / [tap, Cin, 2C])
# ----------------------------------------------------------------------------
def init_params(key, *, in_channels, kernels, dilations, blocks,
                timbre_embedding_channels):
    C, E = in_channels, timbre_embedding_channels
    n_layers = len(dilations) + blocks
    keys = iter(jax.random.split(key, 4 + 4 * n_layers))

    def rnd(shape, scale=0.1):
        v = scale * jax.random.normal(next(keys), shape, dtype=jnp.float32)
        return v.astype(jnp.bfloat16)

    params = {
        "preconv_w": rnd((C, C)), "preconv_b": rnd((1, C)),
        "proj_w": rnd((C, C)),    "proj_b": rnd((1, C)),
        "glus": [],
    }
    layer_cfg = [(kernels, d) for d in dilations] + [(1, 1)] * blocks
    for (k, d) in layer_cfg:
        params["glus"].append({
            "k": k, "d": d,
            "w": rnd((k, C, 2 * C)),   # [tap, Cin, 2C]
            "b": rnd((1, 2 * C)),
            "cw": rnd((E, 2 * C)),
            "cb": rnd((1, 2 * C)),
        })
    return params


# ----------------------------------------------------------------------------
# Pure-JAX reference (same math & same bf16 casts, no Pallas)
# ----------------------------------------------------------------------------
def reference(params, inputs, timbre, *, leak):
    f32, bf16 = jnp.float32, jnp.bfloat16
    x = jnp.transpose(inputs, (0, 2, 1)).astype(bf16)
    cond = (jnp.transpose(timbre, (0, 2, 1)).astype(bf16)
            if timbre is not None else None)
    B, T, C = x.shape

    y = (jnp.einsum("btc,cd->btd", x, params["preconv_w"],
                    preferred_element_type=f32) + params["preconv_b"].astype(f32))
    x = jnp.where(y >= 0, y, leak * y)

    for g in params["glus"]:
        k, d = int(g["k"]), int(g["d"])
        wflat = g["w"].reshape(k * C, 2 * C)
        x_bf = x.astype(bf16)
        if k == 1:
            lhs = x_bf
        else:
            p = (k - 1) * d // 2
            xp = jnp.pad(x_bf, ((0, 0), (p, p), (0, 0)))
            lhs = jnp.concatenate([xp[:, j * d:j * d + T, :] for j in range(k)],
                                  axis=-1)
        acc = (jnp.einsum("btk,kd->btd", lhs, wflat, preferred_element_type=f32)
               + g["b"].astype(f32))
        a, gate = acc[..., :C], acc[..., C:]
        y = x + a * jax.nn.sigmoid(gate)
        if cond is not None:
            mean = jnp.mean(y, axis=1, keepdims=True)
            var = jnp.mean((y - mean) ** 2, axis=1, keepdims=True)
            y = (y - mean) * jax.lax.rsqrt(var + 1e-5)
            wb = (jnp.einsum("bte,ed->btd", cond, g["cw"],
                             preferred_element_type=f32) + g["cb"].astype(f32))
            y = y * wb[..., :C] + wb[..., C:]
        x = y

    out = (jnp.einsum("btc,cd->btd", x.astype(bf16), params["proj_w"],
                      preferred_element_type=f32) + params["proj_b"].astype(f32))
    return jnp.transpose(out, (0, 2, 1))


# ----------------------------------------------------------------------------
if __name__ == "__main__":
    B, C, T, E = 2, 32, 16, 16
    kernels, dilations, blocks = 3, [1, 3], 2
    leak = 0.2   # dropout_rate unused: Dropout is identity in eval mode

    key = jax.random.PRNGKey(0)
    k_par, k_in, k_tim = jax.random.split(key, 3)
    params = init_params(k_par, in_channels=C, kernels=kernels,
                         dilations=dilations, blocks=blocks,
                         timbre_embedding_channels=E)
    inputs = jax.random.normal(k_in, (B, C, T), dtype=jnp.float32)
    timbre = jax.random.normal(k_tim, (B, E, T), dtype=jnp.float32)

    # Conditioned path (timbre provided).
    out = jax.block_until_ready(
        frame_level_synthesizer(params, inputs, timbre, leak=leak))
    ref = jax.block_until_ready(reference(params, inputs, timbre, leak=leak))
    np.testing.assert_allclose(np.asarray(out), np.asarray(ref),
                               rtol=1e-3, atol=1e-3)
    assert out.shape == (B, C, T)

    # Unconditioned path (timbre=None) exercises the cond-free kernel variant.
    out_nc = jax.block_until_ready(
        frame_level_synthesizer(params, inputs, None, leak=leak))
    ref_nc = jax.block_until_ready(reference(params, inputs, None, leak=leak))
    np.testing.assert_allclose(np.asarray(out_nc), np.asarray(ref_nc),
                               rtol=1e-3, atol=1e-3)

    print("KERNEL_OK")
</pallas_src>

<mosaic_0001>
module attributes {stable_mosaic.version = 11 : i64} {
  func.func @kernel(%arg0: i32, %arg1: memref<1x16x32xbf16, #tpu.memory_space<vmem>>, %arg2: memref<1x16x16xbf16, #tpu.memory_space<vmem>>, %arg3: memref<32x32xbf16, #tpu.memory_space<vmem>>, %arg4: memref<1x32xbf16, #tpu.memory_space<vmem>>, %arg5: memref<96x64xbf16, #tpu.memory_space<vmem>>, %arg6: memref<1x64xbf16, #tpu.memory_space<vmem>>, %arg7: memref<16x64xbf16, #tpu.memory_space<vmem>>, %arg8: memref<1x64xbf16, #tpu.memory_space<vmem>>, %arg9: memref<96x64xbf16, #tpu.memory_space<vmem>>, %arg10: memref<1x64xbf16, #tpu.memory_space<vmem>>, %arg11: memref<16x64xbf16, #tpu.memory_space<vmem>>, %arg12: memref<1x64xbf16, #tpu.memory_space<vmem>>, %arg13: memref<32x64xbf16, #tpu.memory_space<vmem>>, %arg14: memref<1x64xbf16, #tpu.memory_space<vmem>>, %arg15: memref<16x64xbf16, #tpu.memory_space<vmem>>, %arg16: memref<1x64xbf16, #tpu.memory_space<vmem>>, %arg17: memref<32x64xbf16, #tpu.memory_space<vmem>>, %arg18: memref<1x64xbf16, #tpu.memory_space<vmem>>, %arg19: memref<16x64xbf16, #tpu.memory_space<vmem>>, %arg20: memref<1x64xbf16, #tpu.memory_space<vmem>>, %arg21: memref<32x32xbf16, #tpu.memory_space<vmem>>, %arg22: memref<1x32xbf16, #tpu.memory_space<vmem>>, %arg23: memref<1x16x32xf32, #tpu.memory_space<vmem>>, %arg24: memref<27x32xf32, #tpu.memory_space<vmem>>) attributes {dimension_semantics = [#tpu.dimension_semantics<parallel>], iteration_bounds = array<i64: 2>, scalar_prefetch = 0 : i64, scratch_operands = 1 : i64, tpu.core_type = #tpu.core_type<tc>, window_params = [{transform_indices = @transform_0, window_bounds = array<i64: 1, 16, 32>}, {transform_indices = @transform_1, window_bounds = array<i64: 1, 16, 16>}, {pipeline_mode = #tpu.pipeline_mode<synchronous>, transform_indices = @transform_2, window_bounds = array<i64: 32, 32>}, {pipeline_mode = #tpu.pipeline_mode<synchronous>, transform_indices = @transform_3, window_bounds = array<i64: 1, 32>}, {pipeline_mode = #tpu.pipeline_mode<synchronous>, transform_indices = @transform_4, window_bounds = array<i64: 96, 64>}, {pipeline_mode = #tpu.pipeline_mode<synchronous>, transform_indices = @transform_5, window_bounds = array<i64: 1, 64>}, {pipeline_mode = #tpu.pipeline_mode<synchronous>, transform_indices = @transform_6, window_bounds = array<i64: 16, 64>}, {pipeline_mode = #tpu.pipeline_mode<synchronous>, transform_indices = @transform_7, window_bounds = array<i64: 1, 64>}, {pipeline_mode = #tpu.pipeline_mode<synchronous>, transform_indices = @transform_8, window_bounds = array<i64: 96, 64>}, {pipeline_mode = #tpu.pipeline_mode<synchronous>, transform_indices = @transform_9, window_bounds = array<i64: 1, 64>}, {pipeline_mode = #tpu.pipeline_mode<synchronous>, transform_indices = @transform_10, window_bounds = array<i64: 16, 64>}, {pipeline_mode = #tpu.pipeline_mode<synchronous>, transform_indices = @transform_11, window_bounds = array<i64: 1, 64>}, {pipeline_mode = #tpu.pipeline_mode<synchronous>, transform_indices = @transform_12, window_bounds = array<i64: 32, 64>}, {pipeline_mode = #tpu.pipeline_mode<synchronous>, transform_indices = @transform_13, window_bounds = array<i64: 1, 64>}, {pipeline_mode = #tpu.pipeline_mode<synchronous>, transform_indices = @transform_14, window_bounds = array<i64: 16, 64>}, {pipeline_mode = #tpu.pipeline_mode<synchronous>, transform_indices = @transform_15, window_bounds = array<i64: 1, 64>}, {pipeline_mode = #tpu.pipeline_mode<synchronous>, transform_indices = @transform_16, window_bounds = array<i64: 32, 64>}, {pipeline_mode = #tpu.pipeline_mode<synchronous>, transform_indices = @transform_17, window_bounds = array<i64: 1, 64>}, {pipeline_mode = #tpu.pipeline_mode<synchronous>, transform_indices = @transform_18, window_bounds = array<i64: 16, 64>}, {pipeline_mode = #tpu.pipeline_mode<synchronous>, transform_indices = @transform_19, window_bounds = array<i64: 1, 64>}, {pipeline_mode = #tpu.pipeline_mode<synchronous>, transform_indices = @transform_20, window_bounds = array<i64: 32, 32>}, {pipeline_mode = #tpu.pipeline_mode<synchronous>, transform_indices = @transform_21, window_bounds = array<i64: 1, 32>}, {transform_indices = @transform_22, window_bounds = array<i64: 1, 16, 32>}]} {
    %c0 = arith.constant 0 : index
    %c0_0 = arith.constant 0 : index
    %c0_1 = arith.constant 0 : index
    %0 = vector.load %arg1[%c0, %c0_0, %c0_1] : memref<1x16x32xbf16, #tpu.memory_space<vmem>>, vector<1x16x32xbf16>
    %1 = vector.shape_cast %0 : vector<1x16x32xbf16> to vector<16x32xbf16>
    %c0_2 = arith.constant 0 : index
    %c0_3 = arith.constant 0 : index
    %2 = vector.load %arg3[%c0_2, %c0_3] : memref<32x32xbf16, #tpu.memory_space<vmem>>, vector<32x32xbf16>
    %cst = arith.constant dense<0.000000e+00> : vector<16x32xf32>
    %3 = tpu.matmul %1, %2, %cst {dimension_numbers = #tpu.dot_dimension_numbers<[1], [0], [0], [1], [0, 0, 1, 1], [], []>} : vector<16x32xbf16>, vector<32x32xbf16>, vector<16x32xf32> -> vector<16x32xf32>
    %c0_4 = arith.constant 0 : index
    %c0_5 = arith.constant 0 : index
    %4 = vector.load %arg4[%c0_4, %c0_5] : memref<1x32xbf16, #tpu.memory_space<vmem>>, vector<1x32xbf16>
    %5 = arith.extf %4 : vector<1x32xbf16> to vector<1x32xf32>
    %6 = vector.broadcast %5 : vector<1x32xf32> to vector<16x32xf32>
    %7 = arith.addf %3, %6 : vector<16x32xf32>
    %cst_6 = arith.constant 0.000000e+00 : f32
    %8 = vector.broadcast %cst_6 : f32 to vector<16x32xf32>
    %9 = arith.cmpf oge, %7, %8 : vector<16x32xf32>
    %cst_7 = arith.constant 2.000000e-01 : f32
    %10 = vector.broadcast %cst_7 : f32 to vector<16x32xf32>
    %11 = arith.mulf %10, %7 : vector<16x32xf32>
    %12 = arith.select %9, %7, %11 : vector<16x32xi1>, vector<16x32xf32>
    %c0_8 = arith.constant 0 : index
    %c0_9 = arith.constant 0 : index
    %c0_10 = arith.constant 0 : index
    %13 = vector.load %arg2[%c0_8, %c0_9, %c0_10] : memref<1x16x16xbf16, #tpu.memory_space<vmem>>, vector<1x16x16xbf16>
    %14 = vector.shape_cast %13 : vector<1x16x16xbf16> to vector<16x16xbf16>
    %cst_11 = arith.constant 0.000000e+00 : f32
    %15 = vector.broadcast %cst_11 : f32 to vector<27x32xf32>
    %c0_12 = arith.constant 0 : index
    %c0_13 = arith.constant 0 : index
    %16 = vector.load %arg24[%c0_12, %c0_13] : memref<27x32xf32, #tpu.memory_space<vmem>>, vector<27x32xf32>
    tpu.vector_store %arg24[%c0_12, %c0_13], %15 {strides = array<i32>} : memref<27x32xf32, #tpu.memory_space<vmem>>, vector<27x32xf32>,
    %c8 = arith.constant 8 : index
    %c0_14 = arith.constant 0 : index
    %17 = vector.load %arg24[%c8, %c0_14] : memref<27x32xf32, #tpu.memory_space<vmem>>, vector<16x32xf32>
    tpu.vector_store %arg24[%c8, %c0_14], %12 {strides = array<i32>} : memref<27x32xf32, #tpu.memory_space<vmem>>, vector<16x32xf32>,
    %c0_15 = arith.constant 0 : index
    %c0_16 = arith.constant 0 : index
    %18 = vector.load %arg24[%c0_15, %c0_16] : memref<27x32xf32, #tpu.memory_space<vmem>>, vector<27x32xf32>
    %19 = vector.extract_strided_slice %18 {offsets = [7, 0], sizes = [16, 32], strides = [1, 1]} : vector<27x32xf32> to vector<16x32xf32>
    %20 = vector.extract_strided_slice %18 {offsets = [8, 0], sizes = [16, 32], strides = [1, 1]} : vector<27x32xf32> to vector<16x32xf32>
    %21 = vector.extract_strided_slice %18 {offsets = [9, 0], sizes = [16, 32], strides = [1, 1]} : vector<27x32xf32> to vector<16x32xf32>
    %22 = tpu.concatenate %19, %20, %21 in 1 : vector<16x32xf32>, vector<16x32xf32>, vector<16x32xf32> -> vector<16x96xf32>
    %23 = arith.truncf %22 : vector<16x96xf32> to vector<16x96xbf16>
    %c0_17 = arith.constant 0 : index
    %c0_18 = arith.constant 0 : index
    %24 = vector.load %arg5[%c0_17, %c0_18] : memref<96x64xbf16, #tpu.memory_space<vmem>>, vector<96x64xbf16>
    %cst_19 = arith.constant dense<0.000000e+00> : vector<16x64xf32>
    %25 = tpu.matmul %23, %24, %cst_19 {dimension_numbers = #tpu.dot_dimension_numbers<[1], [0], [0], [1], [0, 0, 1, 1], [], []>} : vector<16x96xbf16>, vector<96x64xbf16>, vector<16x64xf32> -> vector<16x64xf32>
    %c0_20 = arith.constant 0 : index
    %c0_21 = arith.constant 0 : index
    %26 = vector.load %arg6[%c0_20, %c0_21] : memref<1x64xbf16, #tpu.memory_space<vmem>>, vector<1x64xbf16>
    %27 = arith.extf %26 : vector<1x64xbf16> to vector<1x64xf32>
    %28 = vector.broadcast %27 : vector<1x64xf32> to vector<16x64xf32>
    %29 = arith.addf %25, %28 : vector<16x64xf32>
    %30 = vector.extract_strided_slice %29 {offsets = [0, 0], sizes = [16, 32], strides = [1, 1]} : vector<16x64xf32> to vector<16x32xf32>
    %31 = vector.extract_strided_slice %29 {offsets = [0, 32], sizes = [16, 32], strides = [1, 1]} : vector<16x64xf32> to vector<16x32xf32>
    %32 = arith.negf %31 : vector<16x32xf32>
    %33 = math.exp %32 : vector<16x32xf32>
    %cst_22 = arith.constant 1.000000e+00 : f32
    %34 = vector.broadcast %cst_22 : f32 to vector<16x32xf32>
    %35 = arith.addf %34, %33 : vector<16x32xf32>
    %36 = arith.divf %34, %35 : vector<16x32xf32>
    %37 = arith.mulf %30, %36 : vector<16x32xf32>
    %38 = arith.addf %12, %37 : vector<16x32xf32>
    %cst_23 = arith.constant dense<0.000000e+00> : vector<32xf32>
    %39 = vector.multi_reduction <add>, %38, %cst_23 [0] : vector<16x32xf32> to vector<32xf32>
    %40 = vector.shape_cast %39 : vector<32xf32> to vector<1x32xf32>
    %cst_24 = arith.constant 1.600000e+01 : f32
    %41 = vector.broadcast %cst_24 : f32 to vector<1x32xf32>
    %42 = arith.divf %40, %41 : vector<1x32xf32>
    %43 = vector.broadcast %42 : vector<1x32xf32> to vector<16x32xf32>
    %44 = arith.subf %38, %43 : vector<16x32xf32>
    %45 = arith.mulf %44, %44 : vector<16x32xf32>
    %cst_25 = arith.constant dense<0.000000e+00> : vector<32xf32>
    %46 = vector.multi_reduction <add>, %45, %cst_25 [0] : vector<16x32xf32> to vector<32xf32>
    %47 = vector.shape_cast %46 : vector<32xf32> to vector<1x32xf32>
    %cst_26 = arith.constant 1.600000e+01 : f32
    %48 = vector.broadcast %cst_26 : f32 to vector<1x32xf32>
    %49 = arith.divf %47, %48 : vector<1x32xf32>
    %50 = vector.broadcast %42 : vector<1x32xf32> to vector<16x32xf32>
    %51 = arith.subf %38, %50 : vector<16x32xf32>
    %cst_27 = arith.constant 9.99999974E-6 : f32
    %52 = vector.broadcast %cst_27 : f32 to vector<1x32xf32>
    %53 = arith.addf %49, %52 : vector<1x32xf32>
    %54 = math.rsqrt %53 : vector<1x32xf32>
    %55 = vector.broadcast %54 : vector<1x32xf32> to vector<16x32xf32>
    %56 = arith.mulf %51, %55 : vector<16x32xf32>
    %c0_28 = arith.constant 0 : index
    %c0_29 = arith.constant 0 : index
    %57 = vector.load %arg7[%c0_28, %c0_29] : memref<16x64xbf16, #tpu.memory_space<vmem>>, vector<16x64xbf16>
    %cst_30 = arith.constant dense<0.000000e+00> : vector<16x64xf32>
    %58 = tpu.matmul %14, %57, %cst_30 {dimension_numbers = #tpu.dot_dimension_numbers<[1], [0], [0], [1], [0, 0, 1, 1], [], []>} : vector<16x16xbf16>, vector<16x64xbf16>, vector<16x64xf32> -> vector<16x64xf32>
    %c0_31 = arith.constant 0 : index
    %c0_32 = arith.constant 0 : index
    %59 = vector.load %arg8[%c0_31, %c0_32] : memref<1x64xbf16, #tpu.memory_space<vmem>>, vector<1x64xbf16>
    %60 = arith.extf %59 : vector<1x64xbf16> to vector<1x64xf32>
    %61 = vector.broadcast %60 : vector<1x64xf32> to vector<16x64xf32>
    %62 = arith.addf %58, %61 : vector<16x64xf32>
    %63 = vector.extract_strided_slice %62 {offsets = [0, 0], sizes = [16, 32], strides = [1, 1]} : vector<16x64xf32> to vector<16x32xf32>
    %64 = arith.mulf %56, %63 : vector<16x32xf32>
    %65 = vector.extract_strided_slice %62 {offsets = [0, 32], sizes = [16, 32], strides = [1, 1]} : vector<16x64xf32> to vector<16x32xf32>
    %66 = arith.addf %64, %65 : vector<16x32xf32>
    %c8_33 = arith.constant 8 : index
    %c0_34 = arith.constant 0 : index
    %67 = vector.load %arg24[%c8_33, %c0_34] : memref<27x32xf32, #tpu.memory_space<vmem>>, vector<16x32xf32>
    tpu.vector_store %arg24[%c8_33, %c0_34], %66 {strides = array<i32>} : memref<27x32xf32, #tpu.memory_space<vmem>>, vector<16x32xf32>,
    %c0_35 = arith.constant 0 : index
    %c0_36 = arith.constant 0 : index
    %68 = vector.load %arg24[%c0_35, %c0_36] : memref<27x32xf32, #tpu.memory_space<vmem>>, vector<27x32xf32>
    %69 = vector.extract_strided_slice %68 {offsets = [5, 0], sizes = [16, 32], strides = [1, 1]} : vector<27x32xf32> to vector<16x32xf32>
    %70 = vector.extract_strided_slice %68 {offsets = [8, 0], sizes = [16, 32], strides = [1, 1]} : vector<27x32xf32> to vector<16x32xf32>
    %71 = vector.extract_strided_slice %68 {offsets = [11, 0], sizes = [16, 32], strides = [1, 1]} : vector<27x32xf32> to vector<16x32xf32>
    %72 = tpu.concatenate %69, %70, %71 in 1 : vector<16x32xf32>, vector<16x32xf32>, vector<16x32xf32> -> vector<16x96xf32>
    %73 = arith.truncf %72 : vector<16x96xf32> to vector<16x96xbf16>
    %c0_37 = arith.constant 0 : index
    %c0_38 = arith.constant 0 : index
    %74 = vector.load %arg9[%c0_37, %c0_38] : memref<96x64xbf16, #tpu.memory_space<vmem>>, vector<96x64xbf16>
    %cst_39 = arith.constant dense<0.000000e+00> : vector<16x64xf32>
    %75 = tpu.matmul %73, %74, %cst_39 {dimension_numbers = #tpu.dot_dimension_numbers<[1], [0], [0], [1], [0, 0, 1, 1], [], []>} : vector<16x96xbf16>, vector<96x64xbf16>, vector<16x64xf32> -> vector<16x64xf32>
    %c0_40 = arith.constant 0 : index
    %c0_41 = arith.constant 0 : index
    %76 = vector.load %arg10[%c0_40, %c0_41] : memref<1x64xbf16, #tpu.memory_space<vmem>>, vector<1x64xbf16>
    %77 = arith.extf %76 : vector<1x64xbf16> to vector<1x64xf32>
    %78 = vector.broadcast %77 : vector<1x64xf32> to vector<16x64xf32>
    %79 = arith.addf %75, %78 : vector<16x64xf32>
    %80 = vector.extract_strided_slice %79 {offsets = [0, 0], sizes = [16, 32], strides = [1, 1]} : vector<16x64xf32> to vector<16x32xf32>
    %81 = vector.extract_strided_slice %79 {offsets = [0, 32], sizes = [16, 32], strides = [1, 1]} : vector<16x64xf32> to vector<16x32xf32>
    %82 = arith.negf %81 : vector<16x32xf32>
    %83 = math.exp %82 : vector<16x32xf32>
    %cst_42 = arith.constant 1.000000e+00 : f32
    %84 = vector.broadcast %cst_42 : f32 to vector<16x32xf32>
    %85 = arith.addf %84, %83 : vector<16x32xf32>
    %86 = arith.divf %84, %85 : vector<16x32xf32>
    %87 = arith.mulf %80, %86 : vector<16x32xf32>
    %88 = arith.addf %66, %87 : vector<16x32xf32>
    %cst_43 = arith.constant dense<0.000000e+00> : vector<32xf32>
    %89 = vector.multi_reduction <add>, %88, %cst_43 [0] : vector<16x32xf32> to vector<32xf32>
    %90 = vector.shape_cast %89 : vector<32xf32> to vector<1x32xf32>
    %cst_44 = arith.constant 1.600000e+01 : f32
    %91 = vector.broadcast %cst_44 : f32 to vector<1x32xf32>
    %92 = arith.divf %90, %91 : vector<1x32xf32>
    %93 = vector.broadcast %92 : vector<1x32xf32> to vector<16x32xf32>
    %94 = arith.subf %88, %93 : vector<16x32xf32>
    %95 = arith.mulf %94, %94 : vector<16x32xf32>
    %cst_45 = arith.constant dense<0.000000e+00> : vector<32xf32>
    %96 = vector.multi_reduction <add>, %95, %cst_45 [0] : vector<16x32xf32> to vector<32xf32>
    %97 = vector.shape_cast %96 : vector<32xf32> to vector<1x32xf32>
    %cst_46 = arith.constant 1.600000e+01 : f32
    %98 = vector.broadcast %cst_46 : f32 to vector<1x32xf32>
    %99 = arith.divf %97, %98 : vector<1x32xf32>
    %100 = vector.broadcast %92 : vector<1x32xf32> to vector<16x32xf32>
    %101 = arith.subf %88, %100 : vector<16x32xf32>
    %cst_47 = arith.constant 9.99999974E-6 : f32
    %102 = vector.broadcast %cst_47 : f32 to vector<1x32xf32>
    %103 = arith.addf %99, %102 : vector<1x32xf32>
    %104 = math.rsqrt %103 : vector<1x32xf32>
    %105 = vector.broadcast %104 : vector<1x32xf32> to vector<16x32xf32>
    %106 = arith.mulf %101, %105 : vector<16x32xf32>
    %c0_48 = arith.constant 0 : index
    %c0_49 = arith.constant 0 : index
    %107 = vector.load %arg11[%c0_48, %c0_49] : memref<16x64xbf16, #tpu.memory_space<vmem>>, vector<16x64xbf16>
    %cst_50 = arith.constant dense<0.000000e+00> : vector<16x64xf32>
    %108 = tpu.matmul %14, %107, %cst_50 {dimension_numbers = #tpu.dot_dimension_numbers<[1], [0], [0], [1], [0, 0, 1, 1], [], []>} : vector<16x16xbf16>, vector<16x64xbf16>, vector<16x64xf32> -> vector<16x64xf32>
    %c0_51 = arith.constant 0 : index
    %c0_52 = arith.constant 0 : index
    %109 = vector.load %arg12[%c0_51, %c0_52] : memref<1x64xbf16, #tpu.memory_space<vmem>>, vector<1x64xbf16>
    %110 = arith.extf %109 : vector<1x64xbf16> to vector<1x64xf32>
    %111 = vector.broadcast %110 : vector<1x64xf32> to vector<16x64xf32>
    %112 = arith.addf %108, %111 : vector<16x64xf32>
    %113 = vector.extract_strided_slice %112 {offsets = [0, 0], sizes = [16, 32], strides = [1, 1]} : vector<16x64xf32> to vector<16x32xf32>
    %114 = arith.mulf %106, %113 : vector<16x32xf32>
    %115 = vector.extract_strided_slice %112 {offsets = [0, 32], sizes = [16, 32], strides = [1, 1]} : vector<16x64xf32> to vector<16x32xf32>
    %116 = arith.addf %114, %115 : vector<16x32xf32>
    %117 = arith.truncf %116 : vector<16x32xf32> to vector<16x32xbf16>
    %c0_53 = arith.constant 0 : index
    %c0_54 = arith.constant 0 : index
    %118 = vector.load %arg13[%c0_53, %c0_54] : memref<32x64xbf16, #tpu.memory_space<vmem>>, vector<32x64xbf16>
    %cst_55 = arith.constant dense<0.000000e+00> : vector<16x64xf32>
    %119 = tpu.matmul %117, %118, %cst_55 {dimension_numbers = #tpu.dot_dimension_numbers<[1], [0], [0], [1], [0, 0, 1, 1], [], []>} : vector<16x32xbf16>, vector<32x64xbf16>, vector<16x64xf32> -> vector<16x64xf32>
    %c0_56 = arith.constant 0 : index
    %c0_57 = arith.constant 0 : index
    %120 = vector.load %arg14[%c0_56, %c0_57] : memref<1x64xbf16, #tpu.memory_space<vmem>>, vector<1x64xbf16>
    %121 = arith.extf %120 : vector<1x64xbf16> to vector<1x64xf32>
    %122 = vector.broadcast %121 : vector<1x64xf32> to vector<16x64xf32>
    %123 = arith.addf %119, %122 : vector<16x64xf32>
    %124 = vector.extract_strided_slice %123 {offsets = [0, 0], sizes = [16, 32], strides = [1, 1]} : vector<16x64xf32> to vector<16x32xf32>
    %125 = vector.extract_strided_slice %123 {offsets = [0, 32], sizes = [16, 32], strides = [1, 1]} : vector<16x64xf32> to vector<16x32xf32>
    %126 = arith.negf %125 : vector<16x32xf32>
    %127 = math.exp %126 : vector<16x32xf32>
    %cst_58 = arith.constant 1.000000e+00 : f32
    %128 = vector.broadcast %cst_58 : f32 to vector<16x32xf32>
    %129 = arith.addf %128, %127 : vector<16x32xf32>
    %130 = arith.divf %128, %129 : vector<16x32xf32>
    %131 = arith.mulf %124, %130 : vector<16x32xf32>
    %132 = arith.addf %116, %131 : vector<16x32xf32>
    %cst_59 = arith.constant dense<0.000000e+00> : vector<32xf32>
    %133 = vector.multi_reduction <add>, %132, %cst_59 [0] : vector<16x32xf32> to vector<32xf32>
    %134 = vector.shape_cast %133 : vector<32xf32> to vector<1x32xf32>
    %cst_60 = arith.constant 1.600000e+01 : f32
    %135 = vector.broadcast %cst_60 : f32 to vector<1x32xf32>
    %136 = arith.divf %134, %135 : vector<1x32xf32>
    %137 = vector.broadcast %136 : vector<1x32xf32> to vector<16x32xf32>
    %138 = arith.subf %132, %137 : vector<16x32xf32>
    %139 = arith.mulf %138, %138 : vector<16x32xf32>
    %cst_61 = arith.constant dense<0.000000e+00> : vector<32xf32>
    %140 = vector.multi_reduction <add>, %139, %cst_61 [0] : vector<16x32xf32> to vector<32xf32>
    %141 = vector.shape_cast %140 : vector<32xf32> to vector<1x32xf32>
    %cst_62 = arith.constant 1.600000e+01 : f32
    %142 = vector.broadcast %cst_62 : f32 to vector<1x32xf32>
    %143 = arith.divf %141, %142 : vector<1x32xf32>
    %144 = vector.broadcast %136 : vector<1x32xf32> to vector<16x32xf32>
    %145 = arith.subf %132, %144 : vector<16x32xf32>
    %cst_63 = arith.constant 9.99999974E-6 : f32
    %146 = vector.broadcast %cst_63 : f32 to vector<1x32xf32>
    %147 = arith.addf %143, %146 : vector<1x32xf32>
    %148 = math.rsqrt %147 : vector<1x32xf32>
    %149 = vector.broadcast %148 : vector<1x32xf32> to vector<16x32xf32>
    %150 = arith.mulf %145, %149 : vector<16x32xf32>
    %c0_64 = arith.constant 0 : index
    %c0_65 = arith.constant 0 : index
    %151 = vector.load %arg15[%c0_64, %c0_65] : memref<16x64xbf16, #tpu.memory_space<vmem>>, vector<16x64xbf16>
    %cst_66 = arith.constant dense<0.000000e+00> : vector<16x64xf32>
    %152 = tpu.matmul %14, %151, %cst_66 {dimension_numbers = #tpu.dot_dimension_numbers<[1], [0], [0], [1], [0, 0, 1, 1], [], []>} : vector<16x16xbf16>, vector<16x64xbf16>, vector<16x64xf32> -> vector<16x64xf32>
    %c0_67 = arith.constant 0 : index
    %c0_68 = arith.constant 0 : index
    %153 = vector.load %arg16[%c0_67, %c0_68] : memref<1x64xbf16, #tpu.memory_space<vmem>>, vector<1x64xbf16>
    %154 = arith.extf %153 : vector<1x64xbf16> to vector<1x64xf32>
    %155 = vector.broadcast %154 : vector<1x64xf32> to vector<16x64xf32>
    %156 = arith.addf %152, %155 : vector<16x64xf32>
    %157 = vector.extract_strided_slice %156 {offsets = [0, 0], sizes = [16, 32], strides = [1, 1]} : vector<16x64xf32> to vector<16x32xf32>
    %158 = arith.mulf %150, %157 : vector<16x32xf32>
    %159 = vector.extract_strided_slice %156 {offsets = [0, 32], sizes = [16, 32], strides = [1, 1]} : vector<16x64xf32> to vector<16x32xf32>
    %160 = arith.addf %158, %159 : vector<16x32xf32>
    %161 = arith.truncf %160 : vector<16x32xf32> to vector<16x32xbf16>
    %c0_69 = arith.constant 0 : index
    %c0_70 = arith.constant 0 : index
    %162 = vector.load %arg17[%c0_69, %c0_70] : memref<32x64xbf16, #tpu.memory_space<vmem>>, vector<32x64xbf16>
    %cst_71 = arith.constant dense<0.000000e+00> : vector<16x64xf32>
    %163 = tpu.matmul %161, %162, %cst_71 {dimension_numbers = #tpu.dot_dimension_numbers<[1], [0], [0], [1], [0, 0, 1, 1], [], []>} : vector<16x32xbf16>, vector<32x64xbf16>, vector<16x64xf32> -> vector<16x64xf32>
    %c0_72 = arith.constant 0 : index
    %c0_73 = arith.constant 0 : index
    %164 = vector.load %arg18[%c0_72, %c0_73] : memref<1x64xbf16, #tpu.memory_space<vmem>>, vector<1x64xbf16>
    %165 = arith.extf %164 : vector<1x64xbf16> to vector<1x64xf32>
    %166 = vector.broadcast %165 : vector<1x64xf32> to vector<16x64xf32>
    %167 = arith.addf %163, %166 : vector<16x64xf32>
    %168 = vector.extract_strided_slice %167 {offsets = [0, 0], sizes = [16, 32], strides = [1, 1]} : vector<16x64xf32> to vector<16x32xf32>
    %169 = vector.extract_strided_slice %167 {offsets = [0, 32], sizes = [16, 32], strides = [1, 1]} : vector<16x64xf32> to vector<16x32xf32>
    %170 = arith.negf %169 : vector<16x32xf32>
    %171 = math.exp %170 : vector<16x32xf32>
    %cst_74 = arith.constant 1.000000e+00 : f32
    %172 = vector.broadcast %cst_74 : f32 to vector<16x32xf32>
    %173 = arith.addf %172, %171 : vector<16x32xf32>
    %174 = arith.divf %172, %173 : vector<16x32xf32>
    %175 = arith.mulf %168, %174 : vector<16x32xf32>
    %176 = arith.addf %160, %175 : vector<16x32xf32>
    %cst_75 = arith.constant dense<0.000000e+00> : vector<32xf32>
    %177 = vector.multi_reduction <add>, %176, %cst_75 [0] : vector<16x32xf32> to vector<32xf32>
    %178 = vector.shape_cast %177 : vector<32xf32> to vector<1x32xf32>
    %cst_76 = arith.constant 1.600000e+01 : f32
    %179 = vector.broadcast %cst_76 : f32 to vector<1x32xf32>
    %180 = arith.divf %178, %179 : vector<1x32xf32>
    %181 = vector.broadcast %180 : vector<1x32xf32> to vector<16x32xf32>
    %182 = arith.subf %176, %181 : vector<16x32xf32>
    %183 = arith.mulf %182, %182 : vector<16x32xf32>
    %cst_77 = arith.constant dense<0.000000e+00> : vector<32xf32>
    %184 = vector.multi_reduction <add>, %183, %cst_77 [0] : vector<16x32xf32> to vector<32xf32>
    %185 = vector.shape_cast %184 : vector<32xf32> to vector<1x32xf32>
    %cst_78 = arith.constant 1.600000e+01 : f32
    %186 = vector.broadcast %cst_78 : f32 to vector<1x32xf32>
    %187 = arith.divf %185, %186 : vector<1x32xf32>
    %188 = vector.broadcast %180 : vector<1x32xf32> to vector<16x32xf32>
    %189 = arith.subf %176, %188 : vector<16x32xf32>
    %cst_79 = arith.constant 9.99999974E-6 : f32
    %190 = vector.broadcast %cst_79 : f32 to vector<1x32xf32>
    %191 = arith.addf %187, %190 : vector<1x32xf32>
    %192 = math.rsqrt %191 : vector<1x32xf32>
    %193 = vector.broadcast %192 : vector<1x32xf32> to vector<16x32xf32>
    %194 = arith.mulf %189, %193 : vector<16x32xf32>
    %c0_80 = arith.constant 0 : index
    %c0_81 = arith.constant 0 : index
    %195 = vector.load %arg19[%c0_80, %c0_81] : memref<16x64xbf16, #tpu.memory_space<vmem>>, vector<16x64xbf16>
    %cst_82 = arith.constant dense<0.000000e+00> : vector<16x64xf32>
    %196 = tpu.matmul %14, %195, %cst_82 {dimension_numbers = #tpu.dot_dimension_numbers<[1], [0], [0], [1], [0, 0, 1, 1], [], []>} : vector<16x16xbf16>, vector<16x64xbf16>, vector<16x64xf32> -> vector<16x64xf32>
    %c0_83 = arith.constant 0 : index
    %c0_84 = arith.constant 0 : index
    %197 = vector.load %arg20[%c0_83, %c0_84] : memref<1x64xbf16, #tpu.memory_space<vmem>>, vector<1x64xbf16>
    %198 = arith.extf %197 : vector<1x64xbf16> to vector<1x64xf32>
    %199 = vector.broadcast %198 : vector<1x64xf32> to vector<16x64xf32>
    %200 = arith.addf %196, %199 : vector<16x64xf32>
    %201 = vector.extract_strided_slice %200 {offsets = [0, 0], sizes = [16, 32], strides = [1, 1]} : vector<16x64xf32> to vector<16x32xf32>
    %202 = arith.mulf %194, %201 : vector<16x32xf32>
    %203 = vector.extract_strided_slice %200 {offsets = [0, 32], sizes = [16, 32], strides = [1, 1]} : vector<16x64xf32> to vector<16x32xf32>
    %204 = arith.addf %202, %203 : vector<16x32xf32>
    %205 = arith.truncf %204 : vector<16x32xf32> to vector<16x32xbf16>
    %c0_85 = arith.constant 0 : index
    %c0_86 = arith.constant 0 : index
    %206 = vector.load %arg21[%c0_85, %c0_86] : memref<32x32xbf16, #tpu.memory_space<vmem>>, vector<32x32xbf16>
    %cst_87 = arith.constant dense<0.000000e+00> : vector<16x32xf32>
    %207 = tpu.matmul %205, %206, %cst_87 {dimension_numbers = #tpu.dot_dimension_numbers<[1], [0], [0], [1], [0, 0, 1, 1], [], []>} : vector<16x32xbf16>, vector<32x32xbf16>, vector<16x32xf32> -> vector<16x32xf32>
    %c0_88 = arith.constant 0 : index
    %c0_89 = arith.constant 0 : index
    %208 = vector.load %arg22[%c0_88, %c0_89] : memref<1x32xbf16, #tpu.memory_space<vmem>>, vector<1x32xbf16>
    %209 = arith.extf %208 : vector<1x32xbf16> to vector<1x32xf32>
    %210 = vector.broadcast %209 : vector<1x32xf32> to vector<16x32xf32>
    %211 = arith.addf %207, %210 : vector<16x32xf32>
    %c0_90 = arith.constant 0 : index
    %c0_91 = arith.constant 0 : index
    %c0_92 = arith.constant 0 : index
    %212 = vector.load %arg23[%c0_90, %c0_91, %c0_92] : memref<1x16x32xf32, #tpu.memory_space<vmem>>, vector<1x16x32xf32>
    %213 = vector.shape_cast %212 : vector<1x16x32xf32> to vector<16x32xf32>
    %214 = vector.shape_cast %211 : vector<16x32xf32> to vector<1x16x32xf32>
    tpu.vector_store %arg23[%c0_90, %c0_91, %c0_92], %214 {strides = array<i32>} : memref<1x16x32xf32, #tpu.memory_space<vmem>>, vector<1x16x32xf32>,
    return
  }
  func.func @transform_0(%arg0: i32) -> (i32, i32, i32) {
    %c0_i32 = arith.constant 0 : i32
    %c0_i32_0 = arith.constant 0 : i32
    %c0_i32_1 = arith.constant 0 : i32
    return %arg0, %c0_i32, %c0_i32_0 : i32, i32, i32
  }
  func.func @transform_1(%arg0: i32) -> (i32, i32, i32) {
    %c0_i32 = arith.constant 0 : i32
    %c0_i32_0 = arith.constant 0 : i32
    %c0_i32_1 = arith.constant 0 : i32
    return %arg0, %c0_i32, %c0_i32_0 : i32, i32, i32
  }
  func.func @transform_2(%arg0: i32) -> (i32, i32) {
    %c0_i32 = arith.constant 0 : i32
    %c0_i32_0 = arith.constant 0 : i32
    %c0_i32_1 = arith.constant 0 : i32
    return %c0_i32, %c0_i32_0 : i32, i32
  }
  func.func @transform_3(%arg0: i32) -> (i32, i32) {
    %c0_i32 = arith.constant 0 : i32
    %c0_i32_0 = arith.constant 0 : i32
    %c0_i32_1 = arith.constant 0 : i32
    return %c0_i32, %c0_i32_0 : i32, i32
  }
  func.func @transform_4(%arg0: i32) -> (i32, i32) {
    %c0_i32 = arith.constant 0 : i32
    %c0_i32_0 = arith.constant 0 : i32
    %c0_i32_1 = arith.constant 0 : i32
    return %c0_i32, %c0_i32_0 : i32, i32
  }
  func.func @transform_5(%arg0: i32) -> (i32, i32) {
    %c0_i32 = arith.constant 0 : i32
    %c0_i32_0 = arith.constant 0 : i32
    %c0_i32_1 = arith.constant 0 : i32
    return %c0_i32, %c0_i32_0 : i32, i32
  }
  func.func @transform_6(%arg0: i32) -> (i32, i32) {
    %c0_i32 = arith.constant 0 : i32
    %c0_i32_0 = arith.constant 0 : i32
    %c0_i32_1 = arith.constant 0 : i32
    return %c0_i32, %c0_i32_0 : i32, i32
  }
  func.func @transform_7(%arg0: i32) -> (i32, i32) {
    %c0_i32 = arith.constant 0 : i32
    %c0_i32_0 = arith.constant 0 : i32
    %c0_i32_1 = arith.constant 0 : i32
    return %c0_i32, %c0_i32_0 : i32, i32
  }
  func.func @transform_8(%arg0: i32) -> (i32, i32) {
    %c0_i32 = arith.constant 0 : i32
    %c0_i32_0 = arith.constant 0 : i32
    %c0_i32_1 = arith.constant 0 : i32
    return %c0_i32, %c0_i32_0 : i32, i32
  }
  func.func @transform_9(%arg0: i32) -> (i32, i32) {
    %c0_i32 = arith.constant 0 : i32
    %c0_i32_0 = arith.constant 0 : i32
    %c0_i32_1 = arith.constant 0 : i32
    return %c0_i32, %c0_i32_0 : i32, i32
  }
  func.func @transform_10(%arg0: i32) -> (i32, i32) {
    %c0_i32 = arith.constant 0 : i32
    %c0_i32_0 = arith.constant 0 : i32
    %c0_i32_1 = arith.constant 0 : i32
    return %c0_i32, %c0_i32_0 : i32, i32
  }
  func.func @transform_11(%arg0: i32) -> (i32, i32) {
    %c0_i32 = arith.constant 0 : i32
    %c0_i32_0 = arith.constant 0 : i32
    %c0_i32_1 = arith.constant 0 : i32
    return %c0_i32, %c0_i32_0 : i32, i32
  }
  func.func @transform_12(%arg0: i32) -> (i32, i32) {
    %c0_i32 = arith.constant 0 : i32
    %c0_i32_0 = arith.constant 0 : i32
    %c0_i32_1 = arith.constant 0 : i32
    return %c0_i32, %c0_i32_0 : i32, i32
  }
  func.func @transform_13(%arg0: i32) -> (i32, i32) {
    %c0_i32 = arith.constant 0 : i32
    %c0_i32_0 = arith.constant 0 : i32
    %c0_i32_1 = arith.constant 0 : i32
    return %c0_i32, %c0_i32_0 : i32, i32
  }
  func.func @transform_14(%arg0: i32) -> (i32, i32) {
    %c0_i32 = arith.constant 0 : i32
    %c0_i32_0 = arith.constant 0 : i32
    %c0_i32_1 = arith.constant 0 : i32
    return %c0_i32, %c0_i32_0 : i32, i32
  }
  func.func @transform_15(%arg0: i32) -> (i32, i32) {
    %c0_i32 = arith.constant 0 : i32
    %c0_i32_0 = arith.constant 0 : i32
    %c0_i32_1 = arith.constant 0 : i32
    return %c0_i32, %c0_i32_0 : i32, i32
  }
  func.func @transform_16(%arg0: i32) -> (i32, i32) {
    %c0_i32 = arith.constant 0 : i32
    %c0_i32_0 = arith.constant 0 : i32
    %c0_i32_1 = arith.constant 0 : i32
    return %c0_i32, %c0_i32_0 : i32, i32
  }
  func.func @transform_17(%arg0: i32) -> (i32, i32) {
    %c0_i32 = arith.constant 0 : i32
    %c0_i32_0 = arith.constant 0 : i32
    %c0_i32_1 = arith.constant 0 : i32
    return %c0_i32, %c0_i32_0 : i32, i32
  }
  func.func @transform_18(%arg0: i32) -> (i32, i32) {
    %c0_i32 = arith.constant 0 : i32
    %c0_i32_0 = arith.constant 0 : i32
    %c0_i32_1 = arith.constant 0 : i32
    return %c0_i32, %c0_i32_0 : i32, i32
  }
  func.func @transform_19(%arg0: i32) -> (i32, i32) {
    %c0_i32 = arith.constant 0 : i32
    %c0_i32_0 = arith.constant 0 : i32
    %c0_i32_1 = arith.constant 0 : i32
    return %c0_i32, %c0_i32_0 : i32, i32
  }
  func.func @transform_20(%arg0: i32) -> (i32, i32) {
    %c0_i32 = arith.constant 0 : i32
    %c0_i32_0 = arith.constant 0 : i32
    %c0_i32_1 = arith.constant 0 : i32
    return %c0_i32, %c0_i32_0 : i32, i32
  }
  func.func @transform_21(%arg0: i32) -> (i32, i32) {
    %c0_i32 = arith.constant 0 : i32
    %c0_i32_0 = arith.constant 0 : i32
    %c0_i32_1 = arith.constant 0 : i32
    return %c0_i32, %c0_i32_0 : i32, i32
  }
  func.func @transform_22(%arg0: i32) -> (i32, i32, i32) {
    %c0_i32 = arith.constant 0 : i32
    %c0_i32_0 = arith.constant 0 : i32
    %c0_i32_1 = arith.constant 0 : i32
    return %arg0, %c0_i32, %c0_i32_0 : i32, i32, i32
  }
}

</mosaic_0001>

<llo_original>
// kernel: tpu_custom_call.1
$region0: #{tpu_custom_call.1}
  #allocation0 [shape = 'u32[]', space=smem, size = 0x4, offset = 0x4, fixed_abs, tag = 'smem constant byte address 0x4 - core index']
  #allocation1 [shape = 'u32[144,128]{1,0:T(1,128)}', space=vmem, size = 0x12000, scoped, tag = 'internal scratch']
  #allocation2 [shape = 'f32[27,32]{1,0:T(8,128)}', space=vmem, size = 0x4000, scoped, tag = 'scratch operand']
  %s0 = inlined_call_operand.vmem [shape: bf16[2,16,32], index: 0, kind: input, shape index: {}]
  %s1 = inlined_call_operand.vmem [shape: bf16[2,16,16], index: 1, kind: input, shape index: {}]
  %s2 = inlined_call_operand.vmem [shape: bf16[32,32], index: 2, kind: input, shape index: {}]
  %s3 = inlined_call_operand.vmem [shape: bf16[1,32], index: 3, kind: input, shape index: {}]
  %s4 = inlined_call_operand.vmem [shape: bf16[96,64], index: 4, kind: input, shape index: {}]
  %s5 = inlined_call_operand.vmem [shape: bf16[1,64], index: 5, kind: input, shape index: {}]
  %s6 = inlined_call_operand.vmem [shape: bf16[16,64], index: 6, kind: input, shape index: {}]
  %s7 = inlined_call_operand.vmem [shape: bf16[1,64], index: 7, kind: input, shape index: {}]
  %s8 = inlined_call_operand.vmem [shape: bf16[96,64], index: 8, kind: input, shape index: {}]
  %s9 = inlined_call_operand.vmem [shape: bf16[1,64], index: 9, kind: input, shape index: {}]
  %s10 = inlined_call_operand.vmem [shape: bf16[16,64], index: 10, kind: input, shape index: {}]
  %s11 = inlined_call_operand.vmem [shape: bf16[1,64], index: 11, kind: input, shape index: {}]
  %s12 = inlined_call_operand.vmem [shape: bf16[32,64], index: 12, kind: input, shape index: {}]
  %s13 = inlined_call_operand.vmem [shape: bf16[1,64], index: 13, kind: input, shape index: {}]
  %s14 = inlined_call_operand.vmem [shape: bf16[16,64], index: 14, kind: input, shape index: {}]
  %s15 = inlined_call_operand.vmem [shape: bf16[1,64], index: 15, kind: input, shape index: {}]
  %s16 = inlined_call_operand.vmem [shape: bf16[32,64], index: 16, kind: input, shape index: {}]
  %s17 = inlined_call_operand.vmem [shape: bf16[1,64], index: 17, kind: input, shape index: {}]
  %s18 = inlined_call_operand.vmem [shape: bf16[16,64], index: 18, kind: input, shape index: {}]
  %s19 = inlined_call_operand.vmem [shape: bf16[1,64], index: 19, kind: input, shape index: {}]
  %s20 = inlined_call_operand.vmem [shape: bf16[32,32], index: 20, kind: input, shape index: {}]
  %s21 = inlined_call_operand.vmem [shape: bf16[1,32], index: 21, kind: input, shape index: {}]
  %s22 = inlined_call_operand.hbm [shape: f32[2,16,32], index: 22, kind: output, shape index: {}]
  %s23 = sld [smem:[#allocation0]]
  $region121: #{tpu_custom_call.1} parent=0
    _
  %s25 = ssub.s32 1, %s23
  %s26 = scalar_select 0, %s25, %s23
  $region1: #{tpu_custom_call.1} parent=0
    #allocation3 [shape = 'u8[16384]{0}', space=vmem, size = 0x4000, scoped, tag = 'output window, operand 0']
    #allocation4 [shape = 's32[2]{0}', space=sflag, size = 0x8, scoped, tag = 'scoped memory for tpu_custom_call.1']
    %27 = vsyncpa [#allocation4], 0
    %s28 = scalar_lea.sflag [#allocation4], 1
    %29 = vsyncpa %s28, 0
    loop: start=0, step=1, limit=4
    $region2: #{tpu_custom_call.1} parent=1 // loop_pre_header
      _
    $region3: #{tpu_custom_call.1} parent=1 // loop_header
      %s31 = sphi 0, %s35
      %p32 = scmp.ge.s32.totalorder %s31, 4
      %s41 = sphi 0, %s43
      %s44 = sphi 0, %s41
      %s45 = sphi 0, %s44
      %s61 = sphi 0, %s45
      %s67 = sphi 0, %s69
      %s70 = sphi 0, %s67
      %s71 = sphi 0, %s70
      %s87 = sphi 0, %s71
      %s91 = sphi 0, %s91
      %s93 = sphi 0, %s91
      %s94 = sphi 0, %s93
      %s108 = sphi 0, %s94
      %s112 = sphi 0, %s112
      %s114 = sphi 0, %s112
      %s115 = sphi 0, %s114
      %s129 = sphi 0, %s115
      %s133 = sphi 0, %s133
      %s135 = sphi 0, %s133
      %s136 = sphi 0, %s135
      %s150 = sphi 0, %s136
      %s154 = sphi 0, %s154
      %s156 = sphi 0, %s154
      %s157 = sphi 0, %s156
      %s171 = sphi 0, %s157
      %s175 = sphi 0, %s175
      %s177 = sphi 0, %s175
      %s178 = sphi 0, %s177
      %s192 = sphi 0, %s178
      %s196 = sphi 0, %s196
      %s198 = sphi 0, %s196
      %s199 = sphi 0, %s198
      %s213 = sphi 0, %s199
      %s217 = sphi 0, %s217
      %s219 = sphi 0, %s217
      %s220 = sphi 0, %s219
      %s234 = sphi 0, %s220
      %s238 = sphi 0, %s238
      %s240 = sphi 0, %s238
      %s241 = sphi 0, %s240
      %s255 = sphi 0, %s241
      %s259 = sphi 0, %s259
      %s261 = sphi 0, %s259
      %s262 = sphi 0, %s261
      %s276 = sphi 0, %s262
      %s280 = sphi 0, %s280
      %s282 = sphi 0, %s280
      %s283 = sphi 0, %s282
      %s297 = sphi 0, %s283
      %s301 = sphi 0, %s301
      %s303 = sphi 0, %s301
      %s304 = sphi 0, %s303
      %s318 = sphi 0, %s304
      %s322 = sphi 0, %s322
      %s324 = sphi 0, %s322
      %s325 = sphi 0, %s324
      %s339 = sphi 0, %s325
      %s343 = sphi 0, %s343
      %s345 = sphi 0, %s343
      %s346 = sphi 0, %s345
      %s360 = sphi 0, %s346
      %s364 = sphi 0, %s364
      %s366 = sphi 0, %s364
      %s367 = sphi 0, %s366
      %s381 = sphi 0, %s367
      %s385 = sphi 0, %s385
      %s387 = sphi 0, %s385
      %s388 = sphi 0, %s387
      %s402 = sphi 0, %s388
      %s406 = sphi 0, %s406
      %s408 = sphi 0, %s406
      %s409 = sphi 0, %s408
      %s423 = sphi 0, %s409
      %s427 = sphi 0, %s427
      %s429 = sphi 0, %s427
      %s430 = sphi 0, %s429
      %s444 = sphi 0, %s430
      %s448 = sphi 0, %s448
      %s450 = sphi 0, %s448
      %s451 = sphi 0, %s450
      %s465 = sphi 0, %s451
      %s469 = sphi 0, %s469
      %s471 = sphi 0, %s469
      %s472 = sphi 0, %s471
      %s486 = sphi 0, %s472
      %s490 = sphi 0, %s490
      %s492 = sphi 0, %s490
      %s493 = sphi 0, %s492
      %s507 = sphi 0, %s493
      %s513 = sphi 0, %s515
      %s516 = sphi 0, %s513
      %s517 = sphi 0, %s516
      %s533 = sphi 0, %s517
    $region4: #{tpu_custom_call.1} parent=1 // loop_header_branch
      %34 = sbr.rel (%p32) target = $region8
    $region5: #{tpu_custom_call.1} parent=1 // loop_body
      %s36 = ssub.s32 %s31, 1
      %s37 = ssub.s32 %s31, 2
      %s38 = sadd.s32 %s31, 1
      %s39 = ssub.s32 %s31, %s38
      %p40 = scmp.eq.s32.totalorder %s39, 0
      %s42 = sadd.s32 %s41, 1
      %s43 = scalar_select %p40, %s41, %s42
      %p46 = pneg %p40
      %p47 = scmp.eq.s32.totalorder %s31, 1
      %p48 = por %p46, %p47
      %p49 = scmp.ne.s32.totalorder %s41, %s44
      %p50 = scmp.eq.s32.totalorder %s31, 0
      %p51 = por %p49, %p50
      %p52 = scmp.ne.s32.totalorder %s41, %s44
      %p53 = scmp.eq.s32.totalorder %s36, 1
      %p54 = por %p52, %p53
      %p55 = scmp.ne.s32.totalorder %s44, %s45
      %p56 = scmp.eq.s32.totalorder %s36, 0
      %p57 = por %p55, %p56
      %p58 = scmp.ne.s32.totalorder %s44, %s45
      %p59 = scmp.eq.s32.totalorder %s37, 1
      %p60 = por %p58, %p59
      %p62 = scmp.ne.s32.totalorder %s45, %s61
      %p63 = scmp.eq.s32.totalorder %s37, 0
      %p64 = por %p62, %p63
      %s65 = ssub.s32 %s31, %s38
      %p66 = scmp.eq.s32.totalorder %s65, 0
      %s68 = sadd.s32 %s67, 1
      %s69 = scalar_select %p66, %s67, %s68
      %p72 = pneg %p66
      %p73 = scmp.eq.s32.totalorder %s31, 1
      %p74 = por %p72, %p73
      %p75 = scmp.ne.s32.totalorder %s67, %s70
      %p76 = scmp.eq.s32.totalorder %s31, 0
      %p77 = por %p75, %p76
      %p78 = scmp.ne.s32.totalorder %s67, %s70
      %p79 = scmp.eq.s32.totalorder %s36, 1
      %p80 = por %p78, %p79
      %p81 = scmp.ne.s32.totalorder %s70, %s71
      %p82 = scmp.eq.s32.totalorder %s36, 0
      %p83 = por %p81, %p82
      %p84 = scmp.ne.s32.totalorder %s70, %s71
      %p85 = scmp.eq.s32.totalorder %s37, 1
      %p86 = por %p84, %p85
      %p88 = scmp.ne.s32.totalorder %s71, %s87
      %p89 = scmp.eq.s32.totalorder %s37, 0
      %p90 = por %p88, %p89
      %s92 = sadd.s32 %s91, 1
      %p95 = scmp.eq.s32.totalorder %s31, 1
      %p96 = scmp.ne.s32.totalorder %s91, %s93
      %p97 = scmp.eq.s32.totalorder %s31, 0
      %p98 = por %p96, %p97
      %p99 = scmp.ne.s32.totalorder %s91, %s93
      %p100 = scmp.eq.s32.totalorder %s36, 1
      %p101 = por %p99, %p100
      %p102 = scmp.ne.s32.totalorder %s93, %s94
      %p103 = scmp.eq.s32.totalorder %s36, 0
      %p104 = por %p102, %p103
      %p105 = scmp.ne.s32.totalorder %s93, %s94
      %p106 = scmp.eq.s32.totalorder %s37, 1
      %p107 = por %p105, %p106
      %p109 = scmp.ne.s32.totalorder %s94, %s108
      %p110 = scmp.eq.s32.totalorder %s37, 0
      %p111 = por %p109, %p110
      %s113 = sadd.s32 %s112, 1
      %p116 = scmp.eq.s32.totalorder %s31, 1
      %p117 = scmp.ne.s32.totalorder %s112, %s114
      %p118 = scmp.eq.s32.totalorder %s31, 0
      %p119 = por %p117, %p118
      %p120 = scmp.ne.s32.totalorder %s112, %s114
      %p121 = scmp.eq.s32.totalorder %s36, 1
      %p122 = por %p120, %p121
      %p123 = scmp.ne.s32.totalorder %s114, %s115
      %p124 = scmp.eq.s32.totalorder %s36, 0
      %p125 = por %p123, %p124
      %p126 = scmp.ne.s32.totalorder %s114, %s115
      %p127 = scmp.eq.s32.totalorder %s37, 1
      %p128 = por %p126, %p127
      %p130 = scmp.ne.s32.totalorder %s115, %s129
      %p131 = scmp.eq.s32.totalorder %s37, 0
      %p132 = por %p130, %p131
      %s134 = sadd.s32 %s133, 1
      %p137 = scmp.eq.s32.totalorder %s31, 1
      %p138 = scmp.ne.s32.totalorder %s133, %s135
      %p139 = scmp.eq.s32.totalorder %s31, 0
      %p140 = por %p138, %p139
      %p141 = scmp.ne.s32.totalorder %s133, %s135
      %p142 = scmp.eq.s32.totalorder %s36, 1
      %p143 = por %p141, %p142
      %p144 = scmp.ne.s32.totalorder %s135, %s136
      %p145 = scmp.eq.s32.totalorder %s36, 0
      %p146 = por %p144, %p145
      %p147 = scmp.ne.s32.totalorder %s135, %s136
      %p148 = scmp.eq.s32.totalorder %s37, 1
      %p149 = por %p147, %p148
      %p151 = scmp.ne.s32.totalorder %s136, %s150
      %p152 = scmp.eq.s32.totalorder %s37, 0
      %p153 = por %p151, %p152
      %s155 = sadd.s32 %s154, 1
      %p158 = scmp.eq.s32.totalorder %s31, 1
      %p159 = scmp.ne.s32.totalorder %s154, %s156
      %p160 = scmp.eq.s32.totalorder %s31, 0
      %p161 = por %p159, %p160
      %p162 = scmp.ne.s32.totalorder %s154, %s156
      %p163 = scmp.eq.s32.totalorder %s36, 1
      %p164 = por %p162, %p163
      %p165 = scmp.ne.s32.totalorder %s156, %s157
      %p166 = scmp.eq.s32.totalorder %s36, 0
      %p167 = por %p165, %p166
      %p168 = scmp.ne.s32.totalorder %s156, %s157
      %p169 = scmp.eq.s32.totalorder %s37, 1
      %p170 = por %p168, %p169
      %p172 = scmp.ne.s32.totalorder %s157, %s171
      %p173 = scmp.eq.s32.totalorder %s37, 0
      %p174 = por %p172, %p173
      %s176 = sadd.s32 %s175, 1
      %p179 = scmp.eq.s32.totalorder %s31, 1
      %p180 = scmp.ne.s32.totalorder %s175, %s177
      %p181 = scmp.eq.s32.totalorder %s31, 0
      %p182 = por %p180, %p181
      %p183 = scmp.ne.s32.totalorder %s175, %s177
      %p184 = scmp.eq.s32.totalorder %s36, 1
      %p185 = por %p183, %p184
      %p186 = scmp.ne.s32.totalorder %s177, %s178
      %p187 = scmp.eq.s32.totalorder %s36, 0
      %p188 = por %p186, %p187
      %p189 = scmp.ne.s32.totalorder %s177, %s178
      %p190 = scmp.eq.s32.totalorder %s37, 1
      %p191 = por %p189, %p190
      %p193 = scmp.ne.s32.totalorder %s178, %s192
      %p194 = scmp.eq.s32.totalorder %s37, 0
      %p195 = por %p193, %p194
      %s197 = sadd.s32 %s196, 1
      %p200 = scmp.eq.s32.totalorder %s31, 1
      %p201 = scmp.ne.s32.totalorder %s196, %s198
      %p202 = scmp.eq.s32.totalorder %s31, 0
      %p203 = por %p201, %p202
      %p204 = scmp.ne.s32.totalorder %s196, %s198
      %p205 = scmp.eq.s32.totalorder %s36, 1
      %p206 = por %p204, %p205
      %p207 = scmp.ne.s32.totalorder %s198, %s199
      %p208 = scmp.eq.s32.totalorder %s36, 0
      %p209 = por %p207, %p208
      %p210 = scmp.ne.s32.totalorder %s198, %s199
      %p211 = scmp.eq.s32.totalorder %s37, 1
      %p212 = por %p210, %p211
      %p214 = scmp.ne.s32.totalorder %s199, %s213
      %p215 = scmp.eq.s32.totalorder %s37, 0
      %p216 = por %p214, %p215
      %s218 = sadd.s32 %s217, 1
      %p221 = scmp.eq.s32.totalorder %s31, 1
      %p222 = scmp.ne.s32.totalorder %s217, %s219
      %p223 = scmp.eq.s32.totalorder %s31, 0
      %p224 = por %p222, %p223
      %p225 = scmp.ne.s32.totalorder %s217, %s219
      %p226 = scmp.eq.s32.totalorder %s36, 1
      %p227 = por %p225, %p226
      %p228 = scmp.ne.s32.totalorder %s219, %s220
      %p229 = scmp.eq.s32.totalorder %s36, 0
      %p230 = por %p228, %p229
      %p231 = scmp.ne.s32.totalorder %s219, %s220
      %p232 = scmp.eq.s32.totalorder %s37, 1
      %p233 = por %p231, %p232
      %p235 = scmp.ne.s32.totalorder %s220, %s234
      %p236 = scmp.eq.s32.totalorder %s37, 0
      %p237 = por %p235, %p236
      %s239 = sadd.s32 %s238, 1
      %p242 = scmp.eq.s32.totalorder %s31, 1
      %p243 = scmp.ne.s32.totalorder %s238, %s240
      %p244 = scmp.eq.s32.totalorder %s31, 0
      %p245 = por %p243, %p244
      %p246 = scmp.ne.s32.totalorder %s238, %s240
      %p247 = scmp.eq.s32.totalorder %s36, 1
      %p248 = por %p246, %p247
      %p249 = scmp.ne.s32.totalorder %s240, %s241
      %p250 = scmp.eq.s32.totalorder %s36, 0
      %p251 = por %p249, %p250
      %p252 = scmp.ne.s32.totalorder %s240, %s241
      %p253 = scmp.eq.s32.totalorder %s37, 1
      %p254 = por %p252, %p253
      %p256 = scmp.ne.s32.totalorder %s241, %s255
      %p257 = scmp.eq.s32.totalorder %s37, 0
      %p258 = por %p256, %p257
      %s260 = sadd.s32 %s259, 1
      %p263 = scmp.eq.s32.totalorder %s31, 1
      %p264 = scmp.ne.s32.totalorder %s259, %s261
      %p265 = scmp.eq.s32.totalorder %s31, 0
      %p266 = por %p264, %p265
      %p267 = scmp.ne.s32.totalorder %s259, %s261
      %p268 = scmp.eq.s32.totalorder %s36, 1
      %p269 = por %p267, %p268
      %p270 = scmp.ne.s32.totalorder %s261, %s262
      %p271 = scmp.eq.s32.totalorder %s36, 0
      %p272 = por %p270, %p271
      %p273 = scmp.ne.s32.totalorder %s261, %s262
      %p274 = scmp.eq.s32.totalorder %s37, 1
      %p275 = por %p273, %p274
      %p277 = scmp.ne.s32.totalorder %s262, %s276
      %p278 = scmp.eq.s32.totalorder %s37, 0
      %p279 = por %p277, %p278
      %s281 = sadd.s32 %s280, 1
      %p284 = scmp.eq.s32.totalorder %s31, 1
      %p285 = scmp.ne.s32.totalorder %s280, %s282
      %p286 = scmp.eq.s32.totalorder %s31, 0
      %p287 = por %p285, %p286
      %p288 = scmp.ne.s32.totalorder %s280, %s282
      %p289 = scmp.eq.s32.totalorder %s36, 1
      %p290 = por %p288, %p289
      %p291 = scmp.ne.s32.totalorder %s282, %s283
      %p292 = scmp.eq.s32.totalorder %s36, 0
      %p293 = por %p291, %p292
      %p294 = scmp.ne.s32.totalorder %s282, %s283
      %p295 = scmp.eq.s32.totalorder %s37, 1
      %p296 = por %p294, %p295
      %p298 = scmp.ne.s32.totalorder %s283, %s297
      %p299 = scmp.eq.s32.totalorder %s37, 0
      %p300 = por %p298, %p299
      %s302 = sadd.s32 %s301, 1
      %p305 = scmp.eq.s32.totalorder %s31, 1
      %p306 = scmp.ne.s32.totalorder %s301, %s303
      %p307 = scmp.eq.s32.totalorder %s31, 0
      %p308 = por %p306, %p307
      %p309 = scmp.ne.s32.totalorder %s301, %s303
      %p310 = scmp.eq.s32.totalorder %s36, 1
      %p311 = por %p309, %p310
      %p312 = scmp.ne.s32.totalorder %s303, %s304
      %p313 = scmp.eq.s32.totalorder %s36, 0
      %p314 = por %p312, %p313
      %p315 = scmp.ne.s32.totalorder %s303, %s304
      %p316 = scmp.eq.s32.totalorder %s37, 1
      %p317 = por %p315, %p316
      %p319 = scmp.ne.s32.totalorder %s304, %s318
      %p320 = scmp.eq.s32.totalorder %s37, 0
      %p321 = por %p319, %p320
      %s323 = sadd.s32 %s322, 1
      %p326 = scmp.eq.s32.totalorder %s31, 1
      %p327 = scmp.ne.s32.totalorder %s322, %s324
      %p328 = scmp.eq.s32.totalorder %s31, 0
      %p329 = por %p327, %p328
      %p330 = scmp.ne.s32.totalorder %s322, %s324
      %p331 = scmp.eq.s32.totalorder %s36, 1
      %p332 = por %p330, %p331
      %p333 = scmp.ne.s32.totalorder %s324, %s325
      %p334 = scmp.eq.s32.totalorder %s36, 0
      %p335 = por %p333, %p334
      %p336 = scmp.ne.s32.totalorder %s324, %s325
      %p337 = scmp.eq.s32.totalorder %s37, 1
      %p338 = por %p336, %p337
      %p340 = scmp.ne.s32.totalorder %s325, %s339
      %p341 = scmp.eq.s32.totalorder %s37, 0
      %p342 = por %p340, %p341
      %s344 = sadd.s32 %s343, 1
      %p347 = scmp.eq.s32.totalorder %s31, 1
      %p348 = scmp.ne.s32.totalorder %s343, %s345
      %p349 = scmp.eq.s32.totalorder %s31, 0
      %p350 = por %p348, %p349
      %p351 = scmp.ne.s32.totalorder %s343, %s345
      %p352 = scmp.eq.s32.totalorder %s36, 1
      %p353 = por %p351, %p352
      %p354 = scmp.ne.s32.totalorder %s345, %s346
      %p355 = scmp.eq.s32.totalorder %s36, 0
      %p356 = por %p354, %p355
      %p357 = scmp.ne.s32.totalorder %s345, %s346
      %p358 = scmp.eq.s32.totalorder %s37, 1
      %p359 = por %p357, %p358
      %p361 = scmp.ne.s32.totalorder %s346, %s360
      %p362 = scmp.eq.s32.totalorder %s37, 0
      %p363 = por %p361, %p362
      %s365 = sadd.s32 %s364, 1
      %p368 = scmp.eq.s32.totalorder %s31, 1
      %p369 = scmp.ne.s32.totalorder %s364, %s366
      %p370 = scmp.eq.s32.totalorder %s31, 0
      %p371 = por %p369, %p370
      %p372 = scmp.ne.s32.totalorder %s364, %s366
      %p373 = scmp.eq.s32.totalorder %s36, 1
      %p374 = por %p372, %p373
      %p375 = scmp.ne.s32.totalorder %s366, %s367
      %p376 = scmp.eq.s32.totalorder %s36, 0
      %p377 = por %p375, %p376
      %p378 = scmp.ne.s32.totalorder %s366, %s367
      %p379 = scmp.eq.s32.totalorder %s37, 1
      %p380 = por %p378, %p379
      %p382 = scmp.ne.s32.totalorder %s367, %s381
      %p383 = scmp.eq.s32.totalorder %s37, 0
      %p384 = por %p382, %p383
      %s386 = sadd.s32 %s385, 1
      %p389 = scmp.eq.s32.totalorder %s31, 1
      %p390 = scmp.ne.s32.totalorder %s385, %s387
      %p391 = scmp.eq.s32.totalorder %s31, 0
      %p392 = por %p390, %p391
      %p393 = scmp.ne.s32.totalorder %s385, %s387
      %p394 = scmp.eq.s32.totalorder %s36, 1
      %p395 = por %p393, %p394
      %p396 = scmp.ne.s32.totalorder %s387, %s388
      %p397 = scmp.eq.s32.totalorder %s36, 0
      %p398 = por %p396, %p397
      %p399 = scmp.ne.s32.totalorder %s387, %s388
      %p400 = scmp.eq.s32.totalorder %s37, 1
      %p401 = por %p399, %p400
      %p403 = scmp.ne.s32.totalorder %s388, %s402
      %p404 = scmp.eq.s32.totalorder %s37, 0
      %p405 = por %p403, %p404
      %s407 = sadd.s32 %s406, 1
      %p410 = scmp.eq.s32.totalorder %s31, 1
      %p411 = scmp.ne.s32.totalorder %s406, %s408
      %p412 = scmp.eq.s32.totalorder %s31, 0
      %p413 = por %p411, %p412
      %p414 = scmp.ne.s32.totalorder %s406, %s408
      %p415 = scmp.eq.s32.totalorder %s36, 1
      %p416 = por %p414, %p415
      %p417 = scmp.ne.s32.totalorder %s408, %s409
      %p418 = scmp.eq.s32.totalorder %s36, 0
      %p419 = por %p417, %p418
      %p420 = scmp.ne.s32.totalorder %s408, %s409
      %p421 = scmp.eq.s32.totalorder %s37, 1
      %p422 = por %p420, %p421
      %p424 = scmp.ne.s32.totalorder %s409, %s423
      %p425 = scmp.eq.s32.totalorder %s37, 0
      %p426 = por %p424, %p425
      %s428 = sadd.s32 %s427, 1
      %p431 = scmp.eq.s32.totalorder %s31, 1
      %p432 = scmp.ne.s32.totalorder %s427, %s429
      %p433 = scmp.eq.s32.totalorder %s31, 0
      %p434 = por %p432, %p433
      %p435 = scmp.ne.s32.totalorder %s427, %s429
      %p436 = scmp.eq.s32.totalorder %s36, 1
      %p437 = por %p435, %p436
      %p438 = scmp.ne.s32.totalorder %s429, %s430
      %p439 = scmp.eq.s32.totalorder %s36, 0
      %p440 = por %p438, %p439
      %p441 = scmp.ne.s32.totalorder %s429, %s430
      %p442 = scmp.eq.s32.totalorder %s37, 1
      %p443 = por %p441, %p442
      %p445 = scmp.ne.s32.totalorder %s430, %s444
      %p446 = scmp.eq.s32.totalorder %s37, 0
      %p447 = por %p445, %p446
      %s449 = sadd.s32 %s448, 1
      %p452 = scmp.eq.s32.totalorder %s31, 1
      %p453 = scmp.ne.s32.totalorder %s448, %s450
      %p454 = scmp.eq.s32.totalorder %s31, 0
      %p455 = por %p453, %p454
      %p456 = scmp.ne.s32.totalorder %s448, %s450
      %p457 = scmp.eq.s32.totalorder %s36, 1
      %p458 = por %p456, %p457
      %p459 = scmp.ne.s32.totalorder %s450, %s451
      %p460 = scmp.eq.s32.totalorder %s36, 0
      %p461 = por %p459, %p460
      %p462 = scmp.ne.s32.totalorder %s450, %s451
      %p463 = scmp.eq.s32.totalorder %s37, 1
      %p464 = por %p462, %p463
      %p466 = scmp.ne.s32.totalorder %s451, %s465
      %p467 = scmp.eq.s32.totalorder %s37, 0
      %p468 = por %p466, %p467
      %s470 = sadd.s32 %s469, 1
      %p473 = scmp.eq.s32.totalorder %s31, 1
      %p474 = scmp.ne.s32.totalorder %s469, %s471
      %p475 = scmp.eq.s32.totalorder %s31, 0
      %p476 = por %p474, %p475
      %p477 = scmp.ne.s32.totalorder %s469, %s471
      %p478 = scmp.eq.s32.totalorder %s36, 1
      %p479 = por %p477, %p478
      %p480 = scmp.ne.s32.totalorder %s471, %s472
      %p481 = scmp.eq.s32.totalorder %s36, 0
      %p482 = por %p480, %p481
      %p483 = scmp.ne.s32.totalorder %s471, %s472
      %p484 = scmp.eq.s32.totalorder %s37, 1
      %p485 = por %p483, %p484
      %p487 = scmp.ne.s32.totalorder %s472, %s486
      %p488 = scmp.eq.s32.totalorder %s37, 0
      %p489 = por %p487, %p488
      %s491 = sadd.s32 %s490, 1
      %p494 = scmp.eq.s32.totalorder %s31, 1
      %p495 = scmp.ne.s32.totalorder %s490, %s492
      %p496 = scmp.eq.s32.totalorder %s31, 0
      %p497 = por %p495, %p496
      %p498 = scmp.ne.s32.totalorder %s490, %s492
      %p499 = scmp.eq.s32.totalorder %s36, 1
      %p500 = por %p498, %p499
      %p501 = scmp.ne.s32.totalorder %s492, %s493
      %p502 = scmp.eq.s32.totalorder %s36, 0
      %p503 = por %p501, %p502
      %p504 = scmp.ne.s32.totalorder %s492, %s493
      %p505 = scmp.eq.s32.totalorder %s37, 1
      %p506 = por %p504, %p505
      %p508 = scmp.ne.s32.totalorder %s493, %s507
      %p509 = scmp.eq.s32.totalorder %s37, 0
      %p510 = por %p508, %p509
      %s511 = ssub.s32 %s31, %s38
      %p512 = scmp.eq.s32.totalorder %s511, 0
      %s514 = sadd.s32 %s513, 1
      %s515 = scalar_select %p512, %s513, %s514
      %p518 = pneg %p512
      %p519 = scmp.eq.s32.totalorder %s31, 1
      %p520 = por %p518, %p519
      %p521 = scmp.ne.s32.totalorder %s513, %s516
      %p522 = scmp.eq.s32.totalorder %s31, 0
      %p523 = por %p521, %p522
      %p524 = scmp.ne.s32.totalorder %s513, %s516
      %p525 = scmp.eq.s32.totalorder %s36, 1
      %p526 = por %p524, %p525
      %p527 = scmp.ne.s32.totalorder %s516, %s517
      %p528 = scmp.eq.s32.totalorder %s36, 0
      %p529 = por %p527, %p528
      %p530 = scmp.ne.s32.totalorder %s516, %s517
      %p531 = scmp.eq.s32.totalorder %s37, 1
      %p532 = por %p530, %p531
      %p534 = scmp.ne.s32.totalorder %s517, %s533
      %p535 = scmp.eq.s32.totalorder %s37, 0
      %p536 = por %p534, %p535
      %p537 = scmp.le.s32.totalorder 1, %s31
      %p538 = scmp.lt.s32.totalorder %s31, 3
      %p539 = pnand %p537, %p538
      %p540 = pneg %p539
      // Predicated region
      $region9: #{tpu_custom_call.1} parent=5 // pred_check
        _
      $region10: #{tpu_custom_call.1} parent=5 // pred_check_branch
        %542 = sbr.rel (%p539) target = $region12
      $region11: #{tpu_custom_call.1} parent=5 // pred_region
        %s543 = ssub.s32 %s31, 1
        // Predicated region
        $region13: #{tpu_custom_call.1} parent=11 // pred_check
          %p544 = pneg %p104
        $region14: #{tpu_custom_call.1} parent=11 // pred_check_branch
          %546 = sbr.rel (%p544) target = $region16
        $region15: #{tpu_custom_call.1} parent=11 // pred_region
          _
        $region16: #{tpu_custom_call.1} parent=11 // pred_fallthru
          _
        // Predicated region
        $region17: #{tpu_custom_call.1} parent=11 // pred_check
          %p547 = pneg %p125
        $region18: #{tpu_custom_call.1} parent=11 // pred_check_branch
          %549 = sbr.rel (%p547) target = $region20
        $region19: #{tpu_custom_call.1} parent=11 // pred_region
          _
        $region20: #{tpu_custom_call.1} parent=11 // pred_fallthru
          _
        // Predicated region
        $region21: #{tpu_custom_call.1} parent=11 // pred_check
          %p550 = pneg %p146
        $region22: #{tpu_custom_call.1} parent=11 // pred_check_branch
          %552 = sbr.rel (%p550) target = $region24
        $region23: #{tpu_custom_call.1} parent=11 // pred_region
          _
        $region24: #{tpu_custom_call.1} parent=11 // pred_fallthru
          _
        // Predicated region
        $region25: #{tpu_custom_call.1} parent=11 // pred_check
          %p553 = pneg %p167
        $region26: #{tpu_custom_call.1} parent=11 // pred_check_branch
          %555 = sbr.rel (%p553) target = $region28
        $region27: #{tpu_custom_call.1} parent=11 // pred_region
          _
        $region28: #{tpu_custom_call.1} parent=11 // pred_fallthru
          _
        // Predicated region
        $region29: #{tpu_custom_call.1} parent=11 // pred_check
          %p556 = pneg %p188
        $region30: #{tpu_custom_call.1} parent=11 // pred_check_branch
          %558 = sbr.rel (%p556) target = $region32
        $region31: #{tpu_custom_call.1} parent=11 // pred_region
          _
        $region32: #{tpu_custom_call.1} parent=11 // pred_fallthru
          _
        // Predicated region
        $region33: #{tpu_custom_call.1} parent=11 // pred_check
          %p559 = pneg %p209
        $region34: #{tpu_custom_call.1} parent=11 // pred_check_branch
          %561 = sbr.rel (%p559) target = $region36
        $region35: #{tpu_custom_call.1} parent=11 // pred_region
          _
        $region36: #{tpu_custom_call.1} parent=11 // pred_fallthru
          _
        // Predicated region
        $region37: #{tpu_custom_call.1} parent=11 // pred_check
          %p562 = pneg %p230
        $region38: #{tpu_custom_call.1} parent=11 // pred_check_branch
          %564 = sbr.rel (%p562) target = $region40
        $region39: #{tpu_custom_call.1} parent=11 // pred_region
          _
        $region40: #{tpu_custom_call.1} parent=11 // pred_fallthru
          _
        // Predicated region
        $region41: #{tpu_custom_call.1} parent=11 // pred_check
          %p565 = pneg %p251
        $region42: #{tpu_custom_call.1} parent=11 // pred_check_branch
          %567 = sbr.rel (%p565) target = $region44
        $region43: #{tpu_custom_call.1} parent=11 // pred_region
          _
        $region44: #{tpu_custom_call.1} parent=11 // pred_fallthru
          _
        // Predicated region
        $region45: #{tpu_custom_call.1} parent=11 // pred_check
          %p568 = pneg %p272
        $region46: #{tpu_custom_call.1} parent=11 // pred_check_branch
          %570 = sbr.rel (%p568) target = $region48
        $region47: #{tpu_custom_call.1} parent=11 // pred_region
          _
        $region48: #{tpu_custom_call.1} parent=11 // pred_fallthru
          _
        // Predicated region
        $region49: #{tpu_custom_call.1} parent=11 // pred_check
          %p571 = pneg %p293
        $region50: #{tpu_custom_call.1} parent=11 // pred_check_branch
          %573 = sbr.rel (%p571) target = $region52
        $region51: #{tpu_custom_call.1} parent=11 // pred_region
          _
        $region52: #{tpu_custom_call.1} parent=11 // pred_fallthru
          _
        // Predicated region
        $region53: #{tpu_custom_call.1} parent=11 // pred_check
          %p574 = pneg %p314
        $region54: #{tpu_custom_call.1} parent=11 // pred_check_branch
          %576 = sbr.rel (%p574) target = $region56
        $region55: #{tpu_custom_call.1} parent=11 // pred_region
          _
        $region56: #{tpu_custom_call.1} parent=11 // pred_fallthru
          _
        // Predicated region
        $region57: #{tpu_custom_call.1} parent=11 // pred_check
          %p577 = pneg %p335
        $region58: #{tpu_custom_call.1} parent=11 // pred_check_branch
          %579 = sbr.rel (%p577) target = $region60
        $region59: #{tpu_custom_call.1} parent=11 // pred_region
          _
        $region60: #{tpu_custom_call.1} parent=11 // pred_fallthru
          _
        // Predicated region
        $region61: #{tpu_custom_call.1} parent=11 // pred_check
          %p580 = pneg %p356
        $region62: #{tpu_custom_call.1} parent=11 // pred_check_branch
          %582 = sbr.rel (%p580) target = $region64
        $region63: #{tpu_custom_call.1} parent=11 // pred_region
          _
        $region64: #{tpu_custom_call.1} parent=11 // pred_fallthru
          _
        // Predicated region
        $region65: #{tpu_custom_call.1} parent=11 // pred_check
          %p583 = pneg %p377
        $region66: #{tpu_custom_call.1} parent=11 // pred_check_branch
          %585 = sbr.rel (%p583) target = $region68
        $region67: #{tpu_custom_call.1} parent=11 // pred_region
          _
        $region68: #{tpu_custom_call.1} parent=11 // pred_fallthru
          _
        // Predicated region
        $region69: #{tpu_custom_call.1} parent=11 // pred_check
          %p586 = pneg %p398
        $region70: #{tpu_custom_call.1} parent=11 // pred_check_branch
          %588 = sbr.rel (%p586) target = $region72
        $region71: #{tpu_custom_call.1} parent=11 // pred_region
          _
        $region72: #{tpu_custom_call.1} parent=11 // pred_fallthru
          _
        // Predicated region
        $region73: #{tpu_custom_call.1} parent=11 // pred_check
          %p589 = pneg %p419
        $region74: #{tpu_custom_call.1} parent=11 // pred_check_branch
          %591 = sbr.rel (%p589) target = $region76
        $region75: #{tpu_custom_call.1} parent=11 // pred_region
          _
        $region76: #{tpu_custom_call.1} parent=11 // pred_fallthru
          _
        // Predicated region
        $region77: #{tpu_custom_call.1} parent=11 // pred_check
          %p592 = pneg %p440
        $region78: #{tpu_custom_call.1} parent=11 // pred_check_branch
          %594 = sbr.rel (%p592) target = $region80
        $region79: #{tpu_custom_call.1} parent=11 // pred_region
          _
        $region80: #{tpu_custom_call.1} parent=11 // pred_fallthru
          _
        // Predicated region
        $region81: #{tpu_custom_call.1} parent=11 // pred_check
          %p595 = pneg %p461
        $region82: #{tpu_custom_call.1} parent=11 // pred_check_branch
          %597 = sbr.rel (%p595) target = $region84
        $region83: #{tpu_custom_call.1} parent=11 // pred_region
          _
        $region84: #{tpu_custom_call.1} parent=11 // pred_fallthru
          _
        // Predicated region
        $region85: #{tpu_custom_call.1} parent=11 // pred_check
          %p598 = pneg %p482
        $region86: #{tpu_custom_call.1} parent=11 // pred_check_branch
          %600 = sbr.rel (%p598) target = $region88
        $region87: #{tpu_custom_call.1} parent=11 // pred_region
          _
        $region88: #{tpu_custom_call.1} parent=11 // pred_fallthru
          _
        // Predicated region
        $region89: #{tpu_custom_call.1} parent=11 // pred_check
          %p601 = pneg %p503
        $region90: #{tpu_custom_call.1} parent=11 // pred_check_branch
          %603 = sbr.rel (%p601) target = $region92
        $region91: #{tpu_custom_call.1} parent=11 // pred_region
          _
        $region92: #{tpu_custom_call.1} parent=11 // pred_fallthru
          _
      $region12: #{tpu_custom_call.1} parent=5 // pred_fallthru
        _
      %p604 = scmp.lt.s32.totalorder %s31, 2
      // Predicated region
      $region93: #{tpu_custom_call.1} parent=5 // pred_check
        %p605 = pneg %p604
      $region94: #{tpu_custom_call.1} parent=5 // pred_check_branch
        %607 = sbr.rel (%p605) target = $region96
      $region95: #{tpu_custom_call.1} parent=5 // pred_region
        // Predicated region
        $region97: #{tpu_custom_call.1} parent=95 // pred_check
          %p608 = pneg %p51
        $region98: #{tpu_custom_call.1} parent=95 // pred_check_branch
          %610 = sbr.rel (%p608) target = $region100
        $region99: #{tpu_custom_call.1} parent=95 // pred_region
          %p611 = scmp.lt.s32.totalorder %s31, 1
          %s612 = scalar_select %p611, %s31, 1
          %s613 = smul.addr %s612, 2
          %s614 = smul.addr %s613, 4
          %s615 = scalar_lea.vmem %s0, %s614
        $region100: #{tpu_custom_call.1} parent=95 // pred_fallthru
          _
        // Predicated region
        $region101: #{tpu_custom_call.1} parent=95 // pred_check
          %p616 = pneg %p77
        $region102: #{tpu_custom_call.1} parent=95 // pred_check_branch
          %618 = sbr.rel (%p616) target = $region104
        $region103: #{tpu_custom_call.1} parent=95 // pred_region
          %p619 = scmp.lt.s32.totalorder %s31, 1
          %s620 = scalar_select %p619, %s31, 1
          %s621 = smul.addr %s620, 2
          %s622 = smul.addr %s621, 4
          %s623 = scalar_lea.vmem %s1, %s622
        $region104: #{tpu_custom_call.1} parent=95 // pred_fallthru
          _
      $region96: #{tpu_custom_call.1} parent=5 // pred_fallthru
        _
      %p624 = scmp.le.s32.totalorder 1, %s31
      %p625 = scmp.lt.s32.totalorder %s31, 3
      %p626 = pnand %p624, %p625
      %p627 = pneg %p626
      // Predicated region
      $region105: #{tpu_custom_call.1} parent=5 // pred_check
        _
      $region106: #{tpu_custom_call.1} parent=5 // pred_check_branch
        %629 = sbr.rel (%p626) target = $region108
      $region107: #{tpu_custom_call.1} parent=5 // pred_region
        %s630 = ssub.s32 %s31, 1
        %p631 = scmp.lt.s32.totalorder %s36, 1
        %s632 = scalar_select %p631, %s36, 1
        %s633 = smul.addr %s632, 2
        %s634 = smul.addr %s633, 4
        %s635 = scalar_lea.vmem %s0, %s634
        %p636 = pneg %p57
        %p637 = pneg %p54
        %p638 = scmp.lt.s32.totalorder %s36, 1
        %s639 = scalar_select %p638, %s36, 1
        %s640 = smul.addr %s639, 2
        %s641 = smul.addr %s640, 4
        %s642 = scalar_lea.vmem %s1, %s641
        %p643 = pneg %p83
        %p644 = pneg %p80
        %p645 = pneg %p104
        %p646 = pneg %p101
        %p647 = pneg %p125
        %p648 = pneg %p122
        %p649 = pneg %p146
        %p650 = pneg %p143
        %p651 = pneg %p167
        %p652 = pneg %p164
        %p653 = pneg %p188
        %p654 = pneg %p185
        %p655 = pneg %p209
        %p656 = pneg %p206
        %p657 = pneg %p230
        %p658 = pneg %p227
        %p659 = pneg %p251
        %p660 = pneg %p248
        %p661 = pneg %p272
        %p662 = pneg %p269
        %p663 = pneg %p293
        %p664 = pneg %p290
        %p665 = pneg %p314
        %p666 = pneg %p311
        %p667 = pneg %p335
        %p668 = pneg %p332
        %p669 = pneg %p356
        %p670 = pneg %p353
        %p671 = pneg %p377
        %p672 = pneg %p374
        %p673 = pneg %p398
        %p674 = pneg %p395
        %p675 = pneg %p419
        %p676 = pneg %p416
        %p677 = pneg %p440
        %p678 = pneg %p437
        %p679 = pneg %p461
        %p680 = pneg %p458
        %p681 = pneg %p482
        %p682 = pneg %p479
        %p683 = pneg %p503
        %p684 = pneg %p500
        %p685 = pneg %p529
        %p686 = pneg %p526
        %s687 = sand.u32 %s516, 1
        %s688 = scalar_lea.sflag [#allocation4], %s687
        %s689 = sand.u32 %s516, 1
        %s690 = smul.addr %s689, 16
        %s691 = scalar_lea.vmem [#allocation3], %s690
        %p692 = scmp.lt.s32.totalorder %s36, 1
        %s693 = scalar_select %p692, %s36, 1
        %s694 = smul.addr %s693, 2
        %s695 = smul.addr %s694, 4
        %s696 = scalar_lea.vmem %s0, %s695
        %p697 = scmp.lt.s32.totalorder %s36, 1
        %s698 = scalar_select %p697, %s36, 1
        %s699 = smul.addr %s698, 2
        %s700 = smul.addr %s699, 4
        %s701 = scalar_lea.vmem %s1, %s700
        %v703 = vld [vmem:[%s696] sm:$0xf]
        %v704 = vld [vmem:[%s696 + $0x4] sm:$0xf]
        %v705 = vld [vmem:[%s2] sm:$0xf]
        %v706 = vld [vmem:[%s2 + $0x4] sm:$0xf]
        %v707 = vld [vmem:[%s2 + $0x8] sm:$0xf]
        %v708 = vld [vmem:[%s2 + $0xc] sm:$0xf]
        %v709 = vld [vmem:[%s3] sm:$0x1]
        %v710 = vunpack.c.l.bf16 %v709
        %v711 = vlaneseq
        %v712 = vshrl.u32 %v711, 7
        %v713 = vsub.s32 0, %v712
        %v714 = vrot.slane %v710, %v713
        %v717 = vunpack.c.l.b16 %v703
        %v718 = vunpack.c.l.b16 %v704
        %v719 = vpack.c.b16 %v718, %v717
        %v724 = vunpack.c.l.b16 %v705
        %v725 = vunpack.c.l.b16 %v706
        %v726 = vunpack.c.l.b16 %v707
        %v727 = vunpack.c.l.b16 %v708
        %v728 = vpack.c.b16 %v725, %v724
        %v729 = vpack.c.b16 %v727, %v726
        %vm732 = vcmask 261120
        %v734 = vsel %vm732, %v719, 0
        %736 = vmatprep.subr.bf16.mxu0 0
        %737 = vmatpush1.bf16.msra.mxu0 0
        %738 = vmatprep.subr.bf16.mxu0 0
        %739 = vmatpush1.bf16.msra.mxu0 0
        %740 = vmatprep.subr.bf16.mxu0 0
        %741 = vmatpush1.bf16.msra.mxu0 0
        %742 = vmatprep.subr.bf16.mxu0 0
        %743 = vmatpush1.bf16.msra.mxu0 0
        %744 = vmatprep.subr.bf16.mxu0 0
        %745 = vmatpush1.bf16.msra.mxu0 0
        %746 = vmatprep.subr.bf16.mxu0 0
        %747 = vmatpush1.bf16.msra.mxu0 0
        %748 = vmatprep.subr.bf16.mxu0 0
        %749 = vmatpush1.bf16.msra.mxu0 %v729
        %750 = vmatprep.subr.bf16.mxu0 0
        %751 = vmatpush1.bf16.msra.mxu0 %v728
        %752 = vmatprep.subr.bf16.mxu0 0
        %753 = vmatpush2.bf16.msra.mxu0 0
        %754 = vmatprep.subr.bf16.mxu0 0
        %755 = vmatpush2.bf16.msra.mxu0 0
        %756 = vmatprep.subr.bf16.mxu0 0
        %757 = vmatpush2.bf16.msra.mxu0 0
        %758 = vmatprep.subr.bf16.mxu0 0
        %759 = vmatpush2.bf16.msra.mxu0 0
        %760 = vmatprep.subr.bf16.mxu0 0
        %761 = vmatpush2.bf16.msra.mxu0 0
        %762 = vmatprep.subr.bf16.mxu0 0
        %763 = vmatpush2.bf16.msra.mxu0 0
        %764 = vmatprep.subr.bf16.mxu0 0
        %765 = vmatpush2.bf16.msra.mxu0 0
        %766 = vmatprep.subr.bf16.mxu0 0
        %767 = vmatpush2.bf16.msra.mxu0 0
        %768 = vmatprep.mubr.bf16.mxu0 0
        %769 = vmatmul.mubr.bf16.gmra.mxu0 %v734
        %v770 = vpop.f32.mrf.mxu0
        %v771 = vadd.f32 %v714, %v770
        %v772 = vpop.f32.mrf.mxu0
        %v773 = vpop.f32.mrf.mxu0
        %v774 = vadd.f32 %v714, %v773
        %v775 = vpop.f32.mrf.mxu0
        %776 = vdwg.mxu0
        %vm777 = vcmp.ge.f32.partialorder %v771, 0.0
        %vm778 = vcmp.ge.f32.partialorder %v774, 0.0
        %v779 = vmul.f32 %v771, 0.2
        %v780 = vmul.f32 %v774, 0.2
        %v781 = vsel %vm777, %v771, %v779
        %v782 = vsel %vm778, %v774, %v780
        %v783 = vld [vmem:[%s701] sm:$0xf]
        %v784 = vld [vmem:[%s701 + $0x4] sm:$0xf]
        %785 = vst.msk [vmem:[#allocation2] sm:$0xff] %vm732, 0.0
        %786 = vst.msk [vmem:[#allocation2 + $0x8] sm:$0xff] %vm732, 0.0
        %787 = vst.msk [vmem:[#allocation2 + $0x10] sm:$0xff] %vm732, 0.0
        %vm788 = vcmask 256000
        %789 = vst.msk [vmem:[#allocation2 + $0x18] sm:$0x7] %vm788, 0.0
        %790 = vst.msk [vmem:[#allocation2 + $0x8] sm:$0xff] %vm732, %v781
        %791 = vst.msk [vmem:[#allocation2 + $0x10] sm:$0xff] %vm732, %v782
        %v792 = vld [vmem:[#allocation2] sm:$0xff]
        %v793 = vld [vmem:[#allocation2 + $0x8] sm:$0xff]
        %v794 = vld [vmem:[#allocation2 + $0x10] sm:$0xff]
        %v795 = vld [vmem:[#allocation2 + $0x18] sm:$0x7]
        %vm798 = vcmask 1046528
        %v799 = vrot.slane %v793, 1
        %v800 = vrot.slane %v794, 1
        %v801 = vsel %vm798, %v799, %v800
        %802 = vrot.lane.b32.xlu0 %v799, 32
        %v803 = vpop.permute.xlu0 %802
        %804 = vrot.lane.b32.xlu0 %v801, 32
        %v805 = vpop.permute.xlu0 %804
        %806 = vrot.lane.b32.xlu0 %v800, 32
        %v807 = vpop.permute.xlu0 %806
        %vm812 = vcmask 1045504
        %v813 = vrot.slane %v793, 2
        %v814 = vrot.slane %v794, 2
        %v815 = vsel %vm812, %v813, %v814
        %v816 = vrot.slane %v795, 2
        %v817 = vsel %vm812, %v814, %v816
        %818 = vrot.lane.b32.xlu0 %v813, 64
        %v819 = vpop.permute.xlu0 %818
        %820 = vrot.lane.b32.xlu0 %v815, 64
        %v821 = vpop.permute.xlu0 %820
        %822 = vrot.lane.b32.xlu0 %v817, 64
        %v823 = vpop.permute.xlu0 %822
        %v827 = vsel %vm732, %v792, %v803
        %v828 = vsel %vm732, %v793, %v805
        %v829 = vsel %vm732, %v794, %v807
        %vm830 = vcmask 523264
        %v831 = vsel %vm830, %v827, %v819
        %v832 = vsel %vm830, %v828, %v821
        %v833 = vsel %vm830, %v829, %v823
        %v834 = vpack.c.bf16 %v832, %v831
        %v835 = vpack.c.bf16 %v833, %v833
        %v836 = vld [vmem:[%s4] sm:$0xf]
        %v837 = vld [vmem:[%s4 + $0x4] sm:$0xf]
        %v838 = vld [vmem:[%s4 + $0x8] sm:$0xf]
        %v839 = vld [vmem:[%s4 + $0xc] sm:$0xf]
        %v840 = vld [vmem:[%s4 + $0x10] sm:$0xf]
        %v841 = vld [vmem:[%s4 + $0x14] sm:$0xf]
        %v842 = vld [vmem:[%s4 + $0x18] sm:$0xf]
        %v843 = vld [vmem:[%s4 + $0x1c] sm:$0xf]
        %v844 = vld [vmem:[%s4 + $0x20] sm:$0xf]
        %v845 = vld [vmem:[%s4 + $0x24] sm:$0xf]
        %v846 = vld [vmem:[%s4 + $0x28] sm:$0xf]
        %v847 = vld [vmem:[%s4 + $0x2c] sm:$0xf]
        %v848 = vld [vmem:[%s5] sm:$0x1]
        %v849 = vunpack.c.l.bf16 %v848
        %v850 = vlaneseq
        %v851 = vshrl.u32 %v850, 7
        %v852 = vsub.s32 0, %v851
        %v853 = vrot.slane %v849, %v852
        %vm854 = vsmask.f32 4352
        %v856 = vshrl.u32 %v834, 16
        %v858 = vrot.slane %v856, 3
        %v859 = vshll.u32 %v834, 16
        %v861 = vrot.slane %v859, 4
        %v862 = vor.u32 %v858, %v861
        %v864 = vshrl.u32 %v835, 16
        %v866 = vrot.slane %v864, 3
        %v867 = vshll.u32 %v835, 16
        %v869 = vrot.slane %v867, 4
        %v870 = vor.u32 %v866, %v869
        %v871 = vsel %vm854, %v862, %v870
        %v884 = vunpack.c.l.b16 %v836
        %v885 = vunpack.c.l.b16 %v837
        %v886 = vunpack.c.l.b16 %v838
        %v887 = vunpack.c.l.b16 %v839
        %v888 = vunpack.c.l.b16 %v840
        %v889 = vunpack.c.l.b16 %v841
        %v890 = vunpack.c.l.b16 %v842
        %v891 = vunpack.c.l.b16 %v843
        %v892 = vunpack.c.l.b16 %v844
        %v893 = vunpack.c.l.b16 %v845
        %v894 = vunpack.c.l.b16 %v846
        %v895 = vunpack.c.l.b16 %v847
        %v896 = vpack.c.b16 %v885, %v884
        %v897 = vpack.c.b16 %v887, %v886
        %v898 = vpack.c.b16 %v889, %v888
        %v899 = vpack.c.b16 %v891, %v890
        %v900 = vpack.c.b16 %v893, %v892
        %v901 = vpack.c.b16 %v895, %v894
        %vm908 = vcmask 785408
        %v910 = vsel %vm908, %v871, 0
        %912 = vmatprep.subr.bf16.mxu0 0
        %913 = vmatpush1.bf16.msra.mxu0 0
        %914 = vmatprep.subr.bf16.mxu0 0
        %915 = vmatpush1.bf16.msra.mxu0 0
        %916 = vmatprep.subr.bf16.mxu0 0
        %917 = vmatpush1.bf16.msra.mxu0 %v901
        %918 = vmatprep.subr.bf16.mxu0 0
        %919 = vmatpush1.bf16.msra.mxu0 %v900
        %920 = vmatprep.subr.bf16.mxu0 0
        %921 = vmatpush1.bf16.msra.mxu0 %v899
        %922 = vmatprep.subr.bf16.mxu0 0
        %923 = vmatpush1.bf16.msra.mxu0 %v898
        %924 = vmatprep.subr.bf16.mxu0 0
        %925 = vmatpush1.bf16.msra.mxu0 %v897
        %926 = vmatprep.subr.bf16.mxu0 0
        %927 = vmatpush1.bf16.msra.mxu0 %v896
        %928 = vmatprep.subr.bf16.mxu0 0
        %929 = vmatpush2.bf16.msra.mxu0 0
        %930 = vmatprep.subr.bf16.mxu0 0
        %931 = vmatpush2.bf16.msra.mxu0 0
        %932 = vmatprep.subr.bf16.mxu0 0
        %933 = vmatpush2.bf16.msra.mxu0 0
        %934 = vmatprep.subr.bf16.mxu0 0
        %935 = vmatpush2.bf16.msra.mxu0 0
        %936 = vmatprep.subr.bf16.mxu0 0
        %937 = vmatpush2.bf16.msra.mxu0 0
        %938 = vmatprep.subr.bf16.mxu0 0
        %939 = vmatpush2.bf16.msra.mxu0 0
        %940 = vmatprep.subr.bf16.mxu0 0
        %941 = vmatpush2.bf16.msra.mxu0 0
        %942 = vmatprep.subr.bf16.mxu0 0
        %943 = vmatpush2.bf16.msra.mxu0 0
        %944 = vmatprep.mubr.bf16.mxu0 0
        %945 = vmatmul.mubr.bf16.gmra.mxu0 %v910
        %v946 = vpop.f32.mrf.mxu0
        %v947 = vadd.f32 %v853, %v946
        %v948 = vpop.f32.mrf.mxu0
        %v949 = vpop.f32.mrf.mxu0
        %v950 = vadd.f32 %v853, %v949
        %v951 = vpop.f32.mrf.mxu0
        %952 = vdwg.mxu0
        %v953 = vxor.u32 %v947, 2147483648
        %v954 = vxor.u32 %v950, 2147483648
        %v955 = vmul.f32 %v953, 1.442695
        %v956 = vpow.pop %v955
        %v957 = vmul.f32 %v954, 1.442695
        %v958 = vpow.pop %v957
        %v959 = vadd.f32 %v956, 1.0
        %v960 = vadd.f32 %v958, 1.0
        %v961 = vrcp.pop %v959
        %v962 = vmul.f32 1.0, %v961
        %v963 = vrcp.pop %v960
        %v964 = vmul.f32 1.0, %v963
        %967 = vrot.lane.b32.xlu0 %v962, 96
        %v968 = vpop.permute.xlu0 %967
        %969 = vrot.lane.b32.xlu0 %v964, 96
        %v970 = vpop.permute.xlu0 %969
        %v973 = vmul.f32 %v947, %v968
        %v974 = vmul.f32 %v950, %v970
        %v975 = vadd.f32 %v781, %v973
        %v976 = vadd.f32 %v782, %v974
        %v977 = vsel %vm732, %v975, 0.0
        %v978 = vsel %vm732, %v976, 0.0
        %v979 = vadd.f32 %v977, %v978
        %v980 = vrot.slane %v979, 4
        %v981 = vadd.f32 %v979, %v980
        %v982 = vrot.slane %v981, 2
        %v983 = vadd.f32 %v981, %v982
        %v984 = vrot.slane %v983, 1
        %v985 = vadd.f32 %v983, %v984
        %v986 = vrcp.pop 16.0
        %v987 = vmul.f32 %v985, %v986
        %v988 = vsub.f32 %v975, %v987
        %v989 = vsub.f32 %v976, %v987
        %v990 = vmul.f32 %v988, %v988
        %v991 = vmul.f32 %v989, %v989
        %v992 = vsel %vm732, %v990, 0.0
        %v993 = vsel %vm732, %v991, 0.0
        %v994 = vadd.f32 %v992, %v993
        %v995 = vrot.slane %v994, 4
        %v996 = vadd.f32 %v994, %v995
        %v997 = vrot.slane %v996, 2
        %v998 = vadd.f32 %v996, %v997
        %v999 = vrot.slane %v998, 1
        %v1000 = vadd.f32 %v998, %v999
        %v1001 = vmul.f32 %v1000, %v986
        %v1002 = vadd.f32 %v1001, 1e-05
        %v1003 = vrsqrt.pop %v1002
        %v1004 = vmul.f32 %v988, %v1003
        %v1005 = vmul.f32 %v989, %v1003
        %v1006 = vld [vmem:[%s6] sm:$0xf]
        %v1007 = vld [vmem:[%s6 + $0x4] sm:$0xf]
        %v1008 = vld [vmem:[%s7] sm:$0x1]
        %v1009 = vunpack.c.l.bf16 %v1008
        %v1010 = vlaneseq
        %v1011 = vshrl.u32 %v1010, 7
        %v1012 = vsub.s32 0, %v1011
        %v1013 = vrot.slane %v1009, %v1012
        %v1016 = vunpack.c.l.b16 %v783
        %v1017 = vunpack.c.l.b16 %v784
        %v1018 = vpack.c.b16 %v1017, %v1016
        %v1021 = vunpack.c.l.b16 %v1006
        %v1022 = vunpack.c.l.b16 %v1007
        %v1023 = vpack.c.b16 %v1022, %v1021
        %vm1025 = vcmask 130048
        %v1027 = vsel %vm1025, %v1018, 0
        %1029 = vmatprep.subr.bf16.mxu0 0
        %1030 = vmatpush1.bf16.msra.mxu0 0
        %1031 = vmatprep.subr.bf16.mxu0 0
        %1032 = vmatpush1.bf16.msra.mxu0 0
        %1033 = vmatprep.subr.bf16.mxu0 0
        %1034 = vmatpush1.bf16.msra.mxu0 0
        %1035 = vmatprep.subr.bf16.mxu0 0
        %1036 = vmatpush1.bf16.msra.mxu0 0
        %1037 = vmatprep.subr.bf16.mxu0 0
        %1038 = vmatpush1.bf16.msra.mxu0 0
        %1039 = vmatprep.subr.bf16.mxu0 0
        %1040 = vmatpush1.bf16.msra.mxu0 0
        %1041 = vmatprep.subr.bf16.mxu0 0
        %1042 = vmatpush1.bf16.msra.mxu0 0
        %1043 = vmatprep.subr.bf16.mxu0 0
        %1044 = vmatpush1.bf16.msra.mxu0 %v1023
        %1045 = vmatprep.subr.bf16.mxu0 0
        %1046 = vmatpush2.bf16.msra.mxu0 0
        %1047 = vmatprep.subr.bf16.mxu0 0
        %1048 = vmatpush2.bf16.msra.mxu0 0
        %1049 = vmatprep.subr.bf16.mxu0 0
        %1050 = vmatpush2.bf16.msra.mxu0 0
        %1051 = vmatprep.subr.bf16.mxu0 0
        %1052 = vmatpush2.bf16.msra.mxu0 0
        %1053 = vmatprep.subr.bf16.mxu0 0
        %1054 = vmatpush2.bf16.msra.mxu0 0
        %1055 = vmatprep.subr.bf16.mxu0 0
        %1056 = vmatpush2.bf16.msra.mxu0 0
        %1057 = vmatprep.subr.bf16.mxu0 0
        %1058 = vmatpush2.bf16.msra.mxu0 0
        %1059 = vmatprep.subr.bf16.mxu0 0
        %1060 = vmatpush2.bf16.msra.mxu0 0
        %1061 = vmatprep.mubr.bf16.mxu0 0
        %1062 = vmatmul.mubr.bf16.gmra.mxu0 %v1027
        %v1063 = vpop.f32.mrf.mxu0
        %v1064 = vadd.f32 %v1013, %v1063
        %v1065 = vpop.f32.mrf.mxu0
        %v1066 = vpop.f32.mrf.mxu0
        %v1067 = vadd.f32 %v1013, %v1066
        %v1068 = vpop.f32.mrf.mxu0
        %1069 = vdwg.mxu0
        %v1070 = vmul.f32 %v1004, %v1064
        %v1071 = vmul.f32 %v1005, %v1067
        %1074 = vrot.lane.b32.xlu0 %v1064, 96
        %v1075 = vpop.permute.xlu0 %1074
        %1076 = vrot.lane.b32.xlu0 %v1067, 96
        %v1077 = vpop.permute.xlu0 %1076
        %v1080 = vadd.f32 %v1070, %v1075
        %v1081 = vadd.f32 %v1071, %v1077
        %1082 = vst.msk [vmem:[#allocation2 + $0x8] sm:$0xff] %vm732, %v1080
        %1083 = vst.msk [vmem:[#allocation2 + $0x10] sm:$0xff] %vm732, %v1081
        %v1084 = vld [vmem:[#allocation2] sm:$0xff]
        %v1085 = vld [vmem:[#allocation2 + $0x8] sm:$0xff]
        %v1086 = vld [vmem:[#allocation2 + $0x10] sm:$0xff]
        %v1087 = vld [vmem:[#allocation2 + $0x18] sm:$0x7]
        %vm1090 = vcmask 1044480
        %v1091 = vrot.slane %v1085, 3
        %v1092 = vrot.slane %v1086, 3
        %v1093 = vsel %vm1090, %v1091, %v1092
        %1094 = vrot.lane.b32.xlu0 %v1091, 32
        %v1095 = vpop.permute.xlu0 %1094
        %1096 = vrot.lane.b32.xlu0 %v1093, 32
        %v1097 = vpop.permute.xlu0 %1096
        %1098 = vrot.lane.b32.xlu0 %v1092, 32
        %v1099 = vpop.permute.xlu0 %1098
        %vm1104 = vcmask 1041408
        %v1105 = vrot.slane %v1085, 6
        %v1106 = vrot.slane %v1086, 6
        %v1107 = vsel %vm1104, %v1105, %v1106
        %v1108 = vrot.slane %v1087, 6
        %v1109 = vsel %vm1104, %v1106, %v1108
        %1110 = vrot.lane.b32.xlu0 %v1105, 64
        %v1111 = vpop.permute.xlu0 %1110
        %1112 = vrot.lane.b32.xlu0 %v1107, 64
        %v1113 = vpop.permute.xlu0 %1112
        %1114 = vrot.lane.b32.xlu0 %v1109, 64
        %v1115 = vpop.permute.xlu0 %1114
        %v1119 = vsel %vm732, %v1084, %v1095
        %v1120 = vsel %vm732, %v1085, %v1097
        %v1121 = vsel %vm732, %v1086, %v1099
        %v1122 = vsel %vm830, %v1119, %v1111
        %v1123 = vsel %vm830, %v1120, %v1113
        %v1124 = vsel %vm830, %v1121, %v1115
        %v1125 = vpack.c.bf16 %v1123, %v1122
        %v1126 = vpack.c.bf16 %v1124, %v1124
        %v1127 = vld [vmem:[%s8] sm:$0xf]
        %v1128 = vld [vmem:[%s8 + $0x4] sm:$0xf]
        %v1129 = vld [vmem:[%s8 + $0x8] sm:$0xf]
        %v1130 = vld [vmem:[%s8 + $0xc] sm:$0xf]
        %v1131 = vld [vmem:[%s8 + $0x10] sm:$0xf]
        %v1132 = vld [vmem:[%s8 + $0x14] sm:$0xf]
        %v1133 = vld [vmem:[%s8 + $0x18] sm:$0xf]
        %v1134 = vld [vmem:[%s8 + $0x1c] sm:$0xf]
        %v1135 = vld [vmem:[%s8 + $0x20] sm:$0xf]
        %v1136 = vld [vmem:[%s8 + $0x24] sm:$0xf]
        %v1137 = vld [vmem:[%s8 + $0x28] sm:$0xf]
        %v1138 = vld [vmem:[%s8 + $0x2c] sm:$0xf]
        %v1139 = vld [vmem:[%s9] sm:$0x1]
        %v1140 = vunpack.c.l.bf16 %v1139
        %v1141 = vlaneseq
        %v1142 = vshrl.u32 %v1141, 7
        %v1143 = vsub.s32 0, %v1142
        %v1144 = vrot.slane %v1140, %v1143
        %vm1145 = vsmask.f32 5376
        %v1147 = vshrl.u32 %v1125, 16
        %v1149 = vrot.slane %v1147, 2
        %v1150 = vshll.u32 %v1125, 16
        %v1152 = vrot.slane %v1150, 3
        %v1153 = vor.u32 %v1149, %v1152
        %v1155 = vshrl.u32 %v1126, 16
        %v1157 = vrot.slane %v1155, 2
        %v1158 = vshll.u32 %v1126, 16
        %v1160 = vrot.slane %v1158, 3
        %v1161 = vor.u32 %v1157, %v1160
        %v1162 = vsel %vm1145, %v1153, %v1161
        %v1175 = vunpack.c.l.b16 %v1127
        %v1176 = vunpack.c.l.b16 %v1128
        %v1177 = vunpack.c.l.b16 %v1129
        %v1178 = vunpack.c.l.b16 %v1130
        %v1179 = vunpack.c.l.b16 %v1131
        %v1180 = vunpack.c.l.b16 %v1132
        %v1181 = vunpack.c.l.b16 %v1133
        %v1182 = vunpack.c.l.b16 %v1134
        %v1183 = vunpack.c.l.b16 %v1135
        %v1184 = vunpack.c.l.b16 %v1136
        %v1185 = vunpack.c.l.b16 %v1137
        %v1186 = vunpack.c.l.b16 %v1138
        %v1187 = vpack.c.b16 %v1176, %v1175
        %v1188 = vpack.c.b16 %v1178, %v1177
        %v1189 = vpack.c.b16 %v1180, %v1179
        %v1190 = vpack.c.b16 %v1182, %v1181
        %v1191 = vpack.c.b16 %v1184, %v1183
        %v1192 = vpack.c.b16 %v1186, %v1185
        %v1200 = vsel %vm908, %v1162, 0
        %1202 = vmatprep.subr.bf16.mxu0 0
        %1203 = vmatpush1.bf16.msra.mxu0 0
        %1204 = vmatprep.subr.bf16.mxu0 0
        %1205 = vmatpush1.bf16.msra.mxu0 0
        %1206 = vmatprep.subr.bf16.mxu0 0
        %1207 = vmatpush1.bf16.msra.mxu0 %v1192
        %1208 = vmatprep.subr.bf16.mxu0 0
        %1209 = vmatpush1.bf16.msra.mxu0 %v1191
        %1210 = vmatprep.subr.bf16.mxu0 0
        %1211 = vmatpush1.bf16.msra.mxu0 %v1190
        %1212 = vmatprep.subr.bf16.mxu0 0
        %1213 = vmatpush1.bf16.msra.mxu0 %v1189
        %1214 = vmatprep.subr.bf16.mxu0 0
        %1215 = vmatpush1.bf16.msra.mxu0 %v1188
        %1216 = vmatprep.subr.bf16.mxu0 0
        %1217 = vmatpush1.bf16.msra.mxu0 %v1187
        %1218 = vmatprep.subr.bf16.mxu0 0
        %1219 = vmatpush2.bf16.msra.mxu0 0
        %1220 = vmatprep.subr.bf16.mxu0 0
        %1221 = vmatpush2.bf16.msra.mxu0 0
        %1222 = vmatprep.subr.bf16.mxu0 0
        %1223 = vmatpush2.bf16.msra.mxu0 0
        %1224 = vmatprep.subr.bf16.mxu0 0
        %1225 = vmatpush2.bf16.msra.mxu0 0
        %1226 = vmatprep.subr.bf16.mxu0 0
        %1227 = vmatpush2.bf16.msra.mxu0 0
        %1228 = vmatprep.subr.bf16.mxu0 0
        %1229 = vmatpush2.bf16.msra.mxu0 0
        %1230 = vmatprep.subr.bf16.mxu0 0
        %1231 = vmatpush2.bf16.msra.mxu0 0
        %1232 = vmatprep.subr.bf16.mxu0 0
        %1233 = vmatpush2.bf16.msra.mxu0 0
        %1234 = vmatprep.mubr.bf16.mxu0 0
        %1235 = vmatmul.mubr.bf16.gmra.mxu0 %v1200
        %v1236 = vpop.f32.mrf.mxu0
        %v1237 = vadd.f32 %v1144, %v1236
        %v1238 = vpop.f32.mrf.mxu0
        %v1239 = vpop.f32.mrf.mxu0
        %v1240 = vadd.f32 %v1144, %v1239
        %v1241 = vpop.f32.mrf.mxu0
        %1242 = vdwg.mxu0
        %v1243 = vxor.u32 %v1237, 2147483648
        %v1244 = vxor.u32 %v1240, 2147483648
        %v1245 = vmul.f32 %v1243, 1.442695
        %v1246 = vpow.pop %v1245
        %v1247 = vmul.f32 %v1244, 1.442695
        %v1248 = vpow.pop %v1247
        %v1249 = vadd.f32 %v1246, 1.0
        %v1250 = vadd.f32 %v1248, 1.0
        %v1251 = vrcp.pop %v1249
        %v1252 = vmul.f32 1.0, %v1251
        %v1253 = vrcp.pop %v1250
        %v1254 = vmul.f32 1.0, %v1253
        %1257 = vrot.lane.b32.xlu0 %v1252, 96
        %v1258 = vpop.permute.xlu0 %1257
        %1259 = vrot.lane.b32.xlu0 %v1254, 96
        %v1260 = vpop.permute.xlu0 %1259
        %v1263 = vmul.f32 %v1237, %v1258
        %v1264 = vmul.f32 %v1240, %v1260
        %v1265 = vadd.f32 %v1080, %v1263
        %v1266 = vadd.f32 %v1081, %v1264
        %v1267 = vsel %vm732, %v1265, 0.0
        %v1268 = vsel %vm732, %v1266, 0.0
        %v1269 = vadd.f32 %v1267, %v1268
        %v1270 = vrot.slane %v1269, 4
        %v1271 = vadd.f32 %v1269, %v1270
        %v1272 = vrot.slane %v1271, 2
        %v1273 = vadd.f32 %v1271, %v1272
        %v1274 = vrot.slane %v1273, 1
        %v1275 = vadd.f32 %v1273, %v1274
        %v1276 = vmul.f32 %v1275, %v986
        %v1277 = vsub.f32 %v1265, %v1276
        %v1278 = vsub.f32 %v1266, %v1276
        %v1279 = vmul.f32 %v1277, %v1277
        %v1280 = vmul.f32 %v1278, %v1278
        %v1281 = vsel %vm732, %v1279, 0.0
        %v1282 = vsel %vm732, %v1280, 0.0
        %v1283 = vadd.f32 %v1281, %v1282
        %v1284 = vrot.slane %v1283, 4
        %v1285 = vadd.f32 %v1283, %v1284
        %v1286 = vrot.slane %v1285, 2
        %v1287 = vadd.f32 %v1285, %v1286
        %v1288 = vrot.slane %v1287, 1
        %v1289 = vadd.f32 %v1287, %v1288
        %v1290 = vmul.f32 %v1289, %v986
        %v1291 = vadd.f32 %v1290, 1e-05
        %v1292 = vrsqrt.pop %v1291
        %v1293 = vmul.f32 %v1277, %v1292
        %v1294 = vmul.f32 %v1278, %v1292
        %v1295 = vld [vmem:[%s10] sm:$0xf]
        %v1296 = vld [vmem:[%s10 + $0x4] sm:$0xf]
        %v1297 = vld [vmem:[%s11] sm:$0x1]
        %v1298 = vunpack.c.l.bf16 %v1297
        %v1299 = vlaneseq
        %v1300 = vshrl.u32 %v1299, 7
        %v1301 = vsub.s32 0, %v1300
        %v1302 = vrot.slane %v1298, %v1301
        %v1305 = vunpack.c.l.b16 %v1295
        %v1306 = vunpack.c.l.b16 %v1296
        %v1307 = vpack.c.b16 %v1306, %v1305
        %1309 = vmatprep.subr.bf16.mxu0 0
        %1310 = vmatpush1.bf16.msra.mxu0 0
        %1311 = vmatprep.subr.bf16.mxu0 0
        %1312 = vmatpush1.bf16.msra.mxu0 0
        %1313 = vmatprep.subr.bf16.mxu0 0
        %1314 = vmatpush1.bf16.msra.mxu0 0
        %1315 = vmatprep.subr.bf16.mxu0 0
        %1316 = vmatpush1.bf16.msra.mxu0 0
        %1317 = vmatprep.subr.bf16.mxu0 0
        %1318 = vmatpush1.bf16.msra.mxu0 0
        %1319 = vmatprep.subr.bf16.mxu0 0
        %1320 = vmatpush1.bf16.msra.mxu0 0
        %1321 = vmatprep.subr.bf16.mxu0 0
        %1322 = vmatpush1.bf16.msra.mxu0 0
        %1323 = vmatprep.subr.bf16.mxu0 0
        %1324 = vmatpush1.bf16.msra.mxu0 %v1307
        %1325 = vmatprep.subr.bf16.mxu0 0
        %1326 = vmatpush2.bf16.msra.mxu0 0
        %1327 = vmatprep.subr.bf16.mxu0 0
        %1328 = vmatpush2.bf16.msra.mxu0 0
        %1329 = vmatprep.subr.bf16.mxu0 0
        %1330 = vmatpush2.bf16.msra.mxu0 0
        %1331 = vmatprep.subr.bf16.mxu0 0
        %1332 = vmatpush2.bf16.msra.mxu0 0
        %1333 = vmatprep.subr.bf16.mxu0 0
        %1334 = vmatpush2.bf16.msra.mxu0 0
        %1335 = vmatprep.subr.bf16.mxu0 0
        %1336 = vmatpush2.bf16.msra.mxu0 0
        %1337 = vmatprep.subr.bf16.mxu0 0
        %1338 = vmatpush2.bf16.msra.mxu0 0
        %1339 = vmatprep.subr.bf16.mxu0 0
        %1340 = vmatpush2.bf16.msra.mxu0 0
        %1341 = vmatprep.mubr.bf16.mxu0 0
        %1342 = vmatmul.mubr.bf16.gmra.mxu0 %v1027
        %v1343 = vpop.f32.mrf.mxu0
        %v1344 = vadd.f32 %v1302, %v1343
        %v1345 = vpop.f32.mrf.mxu0
        %v1346 = vpop.f32.mrf.mxu0
        %v1347 = vadd.f32 %v1302, %v1346
        %v1348 = vpop.f32.mrf.mxu0
        %1349 = vdwg.mxu0
        %v1350 = vmul.f32 %v1293, %v1344
        %v1351 = vmul.f32 %v1294, %v1347
        %1354 = vrot.lane.b32.xlu0 %v1344, 96
        %v1355 = vpop.permute.xlu0 %1354
        %1356 = vrot.lane.b32.xlu0 %v1347, 96
        %v1357 = vpop.permute.xlu0 %1356
        %v1360 = vadd.f32 %v1350, %v1355
        %v1361 = vadd.f32 %v1351, %v1357
        %v1362 = vpack.c.bf16 %v1361, %v1360
        %v1363 = vld [vmem:[%s12] sm:$0xf]
        %v1364 = vld [vmem:[%s12 + $0x4] sm:$0xf]
        %v1365 = vld [vmem:[%s12 + $0x8] sm:$0xf]
        %v1366 = vld [vmem:[%s12 + $0xc] sm:$0xf]
        %v1367 = vld [vmem:[%s13] sm:$0x1]
        %v1368 = vunpack.c.l.bf16 %v1367
        %v1369 = vlaneseq
        %v1370 = vshrl.u32 %v1369, 7
        %v1371 = vsub.s32 0, %v1370
        %v1372 = vrot.slane %v1368, %v1371
        %v1377 = vunpack.c.l.b16 %v1363
        %v1378 = vunpack.c.l.b16 %v1364
        %v1379 = vunpack.c.l.b16 %v1365
        %v1380 = vunpack.c.l.b16 %v1366
        %v1381 = vpack.c.b16 %v1378, %v1377
        %v1382 = vpack.c.b16 %v1380, %v1379
        %v1386 = vsel %vm732, %v1362, 0
        %1388 = vmatprep.subr.bf16.mxu0 0
        %1389 = vmatpush1.bf16.msra.mxu0 0
        %1390 = vmatprep.subr.bf16.mxu0 0
        %1391 = vmatpush1.bf16.msra.mxu0 0
        %1392 = vmatprep.subr.bf16.mxu0 0
        %1393 = vmatpush1.bf16.msra.mxu0 0
        %1394 = vmatprep.subr.bf16.mxu0 0
        %1395 = vmatpush1.bf16.msra.mxu0 0
        %1396 = vmatprep.subr.bf16.mxu0 0
        %1397 = vmatpush1.bf16.msra.mxu0 0
        %1398 = vmatprep.subr.bf16.mxu0 0
        %1399 = vmatpush1.bf16.msra.mxu0 0
        %1400 = vmatprep.subr.bf16.mxu0 0
        %1401 = vmatpush1.bf16.msra.mxu0 %v1382
        %1402 = vmatprep.subr.bf16.mxu0 0
        %1403 = vmatpush1.bf16.msra.mxu0 %v1381
        %1404 = vmatprep.subr.bf16.mxu0 0
        %1405 = vmatpush2.bf16.msra.mxu0 0
        %1406 = vmatprep.subr.bf16.mxu0 0
        %1407 = vmatpush2.bf16.msra.mxu0 0
        %1408 = vmatprep.subr.bf16.mxu0 0
        %1409 = vmatpush2.bf16.msra.mxu0 0
        %1410 = vmatprep.subr.bf16.mxu0 0
        %1411 = vmatpush2.bf16.msra.mxu0 0
        %1412 = vmatprep.subr.bf16.mxu0 0
        %1413 = vmatpush2.bf16.msra.mxu0 0
        %1414 = vmatprep.subr.bf16.mxu0 0
        %1415 = vmatpush2.bf16.msra.mxu0 0
        %1416 = vmatprep.subr.bf16.mxu0 0
        %1417 = vmatpush2.bf16.msra.mxu0 0
        %1418 = vmatprep.subr.bf16.mxu0 0
        %1419 = vmatpush2.bf16.msra.mxu0 0
        %1420 = vmatprep.mubr.bf16.mxu0 0
        %1421 = vmatmul.mubr.bf16.gmra.mxu0 %v1386
        %v1422 = vpop.f32.mrf.mxu0
        %v1423 = vadd.f32 %v1372, %v1422
        %v1424 = vpop.f32.mrf.mxu0
        %v1425 = vpop.f32.mrf.mxu0
        %v1426 = vadd.f32 %v1372, %v1425
        %v1427 = vpop.f32.mrf.mxu0
        %1428 = vdwg.mxu0
        %v1429 = vxor.u32 %v1423, 2147483648
        %v1430 = vxor.u32 %v1426, 2147483648
        %v1431 = vmul.f32 %v1429, 1.442695
        %v1432 = vpow.pop %v1431
        %v1433 = vmul.f32 %v1430, 1.442695
        %v1434 = vpow.pop %v1433
        %v1435 = vadd.f32 %v1432, 1.0
        %v1436 = vadd.f32 %v1434, 1.0
        %v1437 = vrcp.pop %v1435
        %v1438 = vmul.f32 1.0, %v1437
        %v1439 = vrcp.pop %v1436
        %v1440 = vmul.f32 1.0, %v1439
        %1443 = vrot.lane.b32.xlu0 %v1438, 96
        %v1444 = vpop.permute.xlu0 %1443
        %1445 = vrot.lane.b32.xlu0 %v1440, 96
        %v1446 = vpop.permute.xlu0 %1445
        %v1449 = vmul.f32 %v1423, %v1444
        %v1450 = vmul.f32 %v1426, %v1446
        %v1451 = vadd.f32 %v1360, %v1449
        %v1452 = vadd.f32 %v1361, %v1450
        %v1453 = vsel %vm732, %v1451, 0.0
        %v1454 = vsel %vm732, %v1452, 0.0
        %v1455 = vadd.f32 %v1453, %v1454
        %v1456 = vrot.slane %v1455, 4
        %v1457 = vadd.f32 %v1455, %v1456
        %v1458 = vrot.slane %v1457, 2
        %v1459 = vadd.f32 %v1457, %v1458
        %v1460 = vrot.slane %v1459, 1
        %v1461 = vadd.f32 %v1459, %v1460
        %v1462 = vmul.f32 %v1461, %v986
        %v1463 = vsub.f32 %v1451, %v1462
        %v1464 = vsub.f32 %v1452, %v1462
        %v1465 = vmul.f32 %v1463, %v1463
        %v1466 = vmul.f32 %v1464, %v1464
        %v1467 = vsel %vm732, %v1465, 0.0
        %v1468 = vsel %vm732, %v1466, 0.0
        %v1469 = vadd.f32 %v1467, %v1468
        %v1470 = vrot.slane %v1469, 4
        %v1471 = vadd.f32 %v1469, %v1470
        %v1472 = vrot.slane %v1471, 2
        %v1473 = vadd.f32 %v1471, %v1472
        %v1474 = vrot.slane %v1473, 1
        %v1475 = vadd.f32 %v1473, %v1474
        %v1476 = vmul.f32 %v1475, %v986
        %v1477 = vadd.f32 %v1476, 1e-05
        %v1478 = vrsqrt.pop %v1477
        %v1479 = vmul.f32 %v1463, %v1478
        %v1480 = vmul.f32 %v1464, %v1478
        %v1481 = vld [vmem:[%s14] sm:$0xf]
        %v1482 = vld [vmem:[%s14 + $0x4] sm:$0xf]
        %v1483 = vld [vmem:[%s15] sm:$0x1]
        %v1484 = vunpack.c.l.bf16 %v1483
        %v1485 = vlaneseq
        %v1486 = vshrl.u32 %v1485, 7
        %v1487 = vsub.s32 0, %v1486
        %v1488 = vrot.slane %v1484, %v1487
        %v1491 = vunpack.c.l.b16 %v1481
        %v1492 = vunpack.c.l.b16 %v1482
        %v1493 = vpack.c.b16 %v1492, %v1491
        %1495 = vmatprep.subr.bf16.mxu0 0
        %1496 = vmatpush1.bf16.msra.mxu0 0
        %1497 = vmatprep.subr.bf16.mxu0 0
        %1498 = vmatpush1.bf16.msra.mxu0 0
        %1499 = vmatprep.subr.bf16.mxu0 0
        %1500 = vmatpush1.bf16.msra.mxu0 0
        %1501 = vmatprep.subr.bf16.mxu0 0
        %1502 = vmatpush1.bf16.msra.mxu0 0
        %1503 = vmatprep.subr.bf16.mxu0 0
        %1504 = vmatpush1.bf16.msra.mxu0 0
        %1505 = vmatprep.subr.bf16.mxu0 0
        %1506 = vmatpush1.bf16.msra.mxu0 0
        %1507 = vmatprep.subr.bf16.mxu0 0
        %1508 = vmatpush1.bf16.msra.mxu0 0
        %1509 = vmatprep.subr.bf16.mxu0 0
        %1510 = vmatpush1.bf16.msra.mxu0 %v1493
        %1511 = vmatprep.subr.bf16.mxu0 0
        %1512 = vmatpush2.bf16.msra.mxu0 0
        %1513 = vmatprep.subr.bf16.mxu0 0
        %1514 = vmatpush2.bf16.msra.mxu0 0
        %1515 = vmatprep.subr.bf16.mxu0 0
        %1516 = vmatpush2.bf16.msra.mxu0 0
        %1517 = vmatprep.subr.bf16.mxu0 0
        %1518 = vmatpush2.bf16.msra.mxu0 0
        %1519 = vmatprep.subr.bf16.mxu0 0
        %1520 = vmatpush2.bf16.msra.mxu0 0
        %1521 = vmatprep.subr.bf16.mxu0 0
        %1522 = vmatpush2.bf16.msra.mxu0 0
        %1523 = vmatprep.subr.bf16.mxu0 0
        %1524 = vmatpush2.bf16.msra.mxu0 0
        %1525 = vmatprep.subr.bf16.mxu0 0
        %1526 = vmatpush2.bf16.msra.mxu0 0
        %1527 = vmatprep.mubr.bf16.mxu0 0
        %1528 = vmatmul.mubr.bf16.gmra.mxu0 %v1027
        %v1529 = vpop.f32.mrf.mxu0
        %v1530 = vadd.f32 %v1488, %v1529
        %v1531 = vpop.f32.mrf.mxu0
        %v1532 = vpop.f32.mrf.mxu0
        %v1533 = vadd.f32 %v1488, %v1532
        %v1534 = vpop.f32.mrf.mxu0
        %1535 = vdwg.mxu0
        %v1536 = vmul.f32 %v1479, %v1530
        %v1537 = vmul.f32 %v1480, %v1533
        %1540 = vrot.lane.b32.xlu0 %v1530, 96
        %v1541 = vpop.permute.xlu0 %1540
        %1542 = vrot.lane.b32.xlu0 %v1533, 96
        %v1543 = vpop.permute.xlu0 %1542
        %v1546 = vadd.f32 %v1536, %v1541
        %v1547 = vadd.f32 %v1537, %v1543
        %v1548 = vpack.c.bf16 %v1547, %v1546
        %v1549 = vld [vmem:[%s16] sm:$0xf]
        %v1550 = vld [vmem:[%s16 + $0x4] sm:$0xf]
        %v1551 = vld [vmem:[%s16 + $0x8] sm:$0xf]
        %v1552 = vld [vmem:[%s16 + $0xc] sm:$0xf]
        %v1553 = vld [vmem:[%s17] sm:$0x1]
        %v1554 = vunpack.c.l.bf16 %v1553
        %v1555 = vlaneseq
        %v1556 = vshrl.u32 %v1555, 7
        %v1557 = vsub.s32 0, %v1556
        %v1558 = vrot.slane %v1554, %v1557
        %v1563 = vunpack.c.l.b16 %v1549
        %v1564 = vunpack.c.l.b16 %v1550
        %v1565 = vunpack.c.l.b16 %v1551
        %v1566 = vunpack.c.l.b16 %v1552
        %v1567 = vpack.c.b16 %v1564, %v1563
        %v1568 = vpack.c.b16 %v1566, %v1565
        %v1572 = vsel %vm732, %v1548, 0
        %1574 = vmatprep.subr.bf16.mxu0 0
        %1575 = vmatpush1.bf16.msra.mxu0 0
        %1576 = vmatprep.subr.bf16.mxu0 0
        %1577 = vmatpush1.bf16.msra.mxu0 0
        %1578 = vmatprep.subr.bf16.mxu0 0
        %1579 = vmatpush1.bf16.msra.mxu0 0
        %1580 = vmatprep.subr.bf16.mxu0 0
        %1581 = vmatpush1.bf16.msra.mxu0 0
        %1582 = vmatprep.subr.bf16.mxu0 0
        %1583 = vmatpush1.bf16.msra.mxu0 0
        %1584 = vmatprep.subr.bf16.mxu0 0
        %1585 = vmatpush1.bf16.msra.mxu0 0
        %1586 = vmatprep.subr.bf16.mxu0 0
        %1587 = vmatpush1.bf16.msra.mxu0 %v1568
        %1588 = vmatprep.subr.bf16.mxu0 0
        %1589 = vmatpush1.bf16.msra.mxu0 %v1567
        %1590 = vmatprep.subr.bf16.mxu0 0
        %1591 = vmatpush2.bf16.msra.mxu0 0
        %1592 = vmatprep.subr.bf16.mxu0 0
        %1593 = vmatpush2.bf16.msra.mxu0 0
        %1594 = vmatprep.subr.bf16.mxu0 0
        %1595 = vmatpush2.bf16.msra.mxu0 0
        %1596 = vmatprep.subr.bf16.mxu0 0
        %1597 = vmatpush2.bf16.msra.mxu0 0
        %1598 = vmatprep.subr.bf16.mxu0 0
        %1599 = vmatpush2.bf16.msra.mxu0 0
        %1600 = vmatprep.subr.bf16.mxu0 0
        %1601 = vmatpush2.bf16.msra.mxu0 0
        %1602 = vmatprep.subr.bf16.mxu0 0
        %1603 = vmatpush2.bf16.msra.mxu0 0
        %1604 = vmatprep.subr.bf16.mxu0 0
        %1605 = vmatpush2.bf16.msra.mxu0 0
        %1606 = vmatprep.mubr.bf16.mxu0 0
        %1607 = vmatmul.mubr.bf16.gmra.mxu0 %v1572
        %v1608 = vpop.f32.mrf.mxu0
        %v1609 = vadd.f32 %v1558, %v1608
        %v1610 = vpop.f32.mrf.mxu0
        %v1611 = vpop.f32.mrf.mxu0
        %v1612 = vadd.f32 %v1558, %v1611
        %v1613 = vpop.f32.mrf.mxu0
        %1614 = vdwg.mxu0
        %v1615 = vxor.u32 %v1609, 2147483648
        %v1616 = vxor.u32 %v1612, 2147483648
        %v1617 = vmul.f32 %v1615, 1.442695
        %v1618 = vpow.pop %v1617
        %v1619 = vmul.f32 %v1616, 1.442695
        %v1620 = vpow.pop %v1619
        %v1621 = vadd.f32 %v1618, 1.0
        %v1622 = vadd.f32 %v1620, 1.0
        %v1623 = vrcp.pop %v1621
        %v1624 = vmul.f32 1.0, %v1623
        %v1625 = vrcp.pop %v1622
        %v1626 = vmul.f32 1.0, %v1625
        %1629 = vrot.lane.b32.xlu0 %v1624, 96
        %v1630 = vpop.permute.xlu0 %1629
        %1631 = vrot.lane.b32.xlu0 %v1626, 96
        %v1632 = vpop.permute.xlu0 %1631
        %v1635 = vmul.f32 %v1609, %v1630
        %v1636 = vmul.f32 %v1612, %v1632
        %v1637 = vadd.f32 %v1546, %v1635
        %v1638 = vadd.f32 %v1547, %v1636
        %v1639 = vsel %vm732, %v1637, 0.0
        %v1640 = vsel %vm732, %v1638, 0.0
        %v1641 = vadd.f32 %v1639, %v1640
        %v1642 = vrot.slane %v1641, 4
        %v1643 = vadd.f32 %v1641, %v1642
        %v1644 = vrot.slane %v1643, 2
        %v1645 = vadd.f32 %v1643, %v1644
        %v1646 = vrot.slane %v1645, 1
        %v1647 = vadd.f32 %v1645, %v1646
        %v1648 = vmul.f32 %v1647, %v986
        %v1649 = vsub.f32 %v1637, %v1648
        %v1650 = vsub.f32 %v1638, %v1648
        %v1651 = vmul.f32 %v1649, %v1649
        %v1652 = vmul.f32 %v1650, %v1650
        %v1653 = vsel %vm732, %v1651, 0.0
        %v1654 = vsel %vm732, %v1652, 0.0
        %v1655 = vadd.f32 %v1653, %v1654
        %v1656 = vrot.slane %v1655, 4
        %v1657 = vadd.f32 %v1655, %v1656
        %v1658 = vrot.slane %v1657, 2
        %v1659 = vadd.f32 %v1657, %v1658
        %v1660 = vrot.slane %v1659, 1
        %v1661 = vadd.f32 %v1659, %v1660
        %v1662 = vmul.f32 %v1661, %v986
        %v1663 = vadd.f32 %v1662, 1e-05
        %v1664 = vrsqrt.pop %v1663
        %v1665 = vmul.f32 %v1649, %v1664
        %v1666 = vmul.f32 %v1650, %v1664
        %v1667 = vld [vmem:[%s18] sm:$0xf]
        %v1668 = vld [vmem:[%s18 + $0x4] sm:$0xf]
        %v1669 = vld [vmem:[%s19] sm:$0x1]
        %v1670 = vunpack.c.l.bf16 %v1669
        %v1671 = vlaneseq
        %v1672 = vshrl.u32 %v1671, 7
        %v1673 = vsub.s32 0, %v1672
        %v1674 = vrot.slane %v1670, %v1673
        %v1677 = vunpack.c.l.b16 %v1667
        %v1678 = vunpack.c.l.b16 %v1668
        %v1679 = vpack.c.b16 %v1678, %v1677
        %1681 = vmatprep.subr.bf16.mxu0 0
        %1682 = vmatpush1.bf16.msra.mxu0 0
        %1683 = vmatprep.subr.bf16.mxu0 0
        %1684 = vmatpush1.bf16.msra.mxu0 0
        %1685 = vmatprep.subr.bf16.mxu0 0
        %1686 = vmatpush1.bf16.msra.mxu0 0
        %1687 = vmatprep.subr.bf16.mxu0 0
        %1688 = vmatpush1.bf16.msra.mxu0 0
        %1689 = vmatprep.subr.bf16.mxu0 0
        %1690 = vmatpush1.bf16.msra.mxu0 0
        %1691 = vmatprep.subr.bf16.mxu0 0
        %1692 = vmatpush1.bf16.msra.mxu0 0
        %1693 = vmatprep.subr.bf16.mxu0 0
        %1694 = vmatpush1.bf16.msra.mxu0 0
        %1695 = vmatprep.subr.bf16.mxu0 0
        %1696 = vmatpush1.bf16.msra.mxu0 %v1679
        %1697 = vmatprep.subr.bf16.mxu0 0
        %1698 = vmatpush2.bf16.msra.mxu0 0
        %1699 = vmatprep.subr.bf16.mxu0 0
        %1700 = vmatpush2.bf16.msra.mxu0 0
        %1701 = vmatprep.subr.bf16.mxu0 0
        %1702 = vmatpush2.bf16.msra.mxu0 0
        %1703 = vmatprep.subr.bf16.mxu0 0
        %1704 = vmatpush2.bf16.msra.mxu0 0
        %1705 = vmatprep.subr.bf16.mxu0 0
        %1706 = vmatpush2.bf16.msra.mxu0 0
        %1707 = vmatprep.subr.bf16.mxu0 0
        %1708 = vmatpush2.bf16.msra.mxu0 0
        %1709 = vmatprep.subr.bf16.mxu0 0
        %1710 = vmatpush2.bf16.msra.mxu0 0
        %1711 = vmatprep.subr.bf16.mxu0 0
        %1712 = vmatpush2.bf16.msra.mxu0 0
        %1713 = vmatprep.mubr.bf16.mxu0 0
        %1714 = vmatmul.mubr.bf16.gmra.mxu0 %v1027
        %v1715 = vpop.f32.mrf.mxu0
        %v1716 = vadd.f32 %v1674, %v1715
        %v1717 = vpop.f32.mrf.mxu0
        %v1718 = vpop.f32.mrf.mxu0
        %v1719 = vadd.f32 %v1674, %v1718
        %v1720 = vpop.f32.mrf.mxu0
        %1721 = vdwg.mxu0
        %v1722 = vmul.f32 %v1665, %v1716
        %v1723 = vmul.f32 %v1666, %v1719
        %1726 = vrot.lane.b32.xlu0 %v1716, 96
        %v1727 = vpop.permute.xlu0 %1726
        %1728 = vrot.lane.b32.xlu0 %v1719, 96
        %v1729 = vpop.permute.xlu0 %1728
        %v1732 = vadd.f32 %v1722, %v1727
        %v1733 = vadd.f32 %v1723, %v1729
        %v1734 = vpack.c.bf16 %v1733, %v1732
        %v1735 = vld [vmem:[%s20] sm:$0xf]
        %v1736 = vld [vmem:[%s20 + $0x4] sm:$0xf]
        %v1737 = vld [vmem:[%s20 + $0x8] sm:$0xf]
        %v1738 = vld [vmem:[%s20 + $0xc] sm:$0xf]
        %v1739 = vld [vmem:[%s21] sm:$0x1]
        %v1740 = vunpack.c.l.bf16 %v1739
        %v1741 = vlaneseq
        %v1742 = vshrl.u32 %v1741, 7
        %v1743 = vsub.s32 0, %v1742
        %v1744 = vrot.slane %v1740, %v1743
        %v1749 = vunpack.c.l.b16 %v1735
        %v1750 = vunpack.c.l.b16 %v1736
        %v1751 = vunpack.c.l.b16 %v1737
        %v1752 = vunpack.c.l.b16 %v1738
        %v1753 = vpack.c.b16 %v1750, %v1749
        %v1754 = vpack.c.b16 %v1752, %v1751
        %v1758 = vsel %vm732, %v1734, 0
        %1760 = vmatprep.subr.bf16.mxu0 0
        %1761 = vmatpush1.bf16.msra.mxu0 0
        %1762 = vmatprep.subr.bf16.mxu0 0
        %1763 = vmatpush1.bf16.msra.mxu0 0
        %1764 = vmatprep.subr.bf16.mxu0 0
        %1765 = vmatpush1.bf16.msra.mxu0 0
        %1766 = vmatprep.subr.bf16.mxu0 0
        %1767 = vmatpush1.bf16.msra.mxu0 0
        %1768 = vmatprep.subr.bf16.mxu0 0
        %1769 = vmatpush1.bf16.msra.mxu0 0
        %1770 = vmatprep.subr.bf16.mxu0 0
        %1771 = vmatpush1.bf16.msra.mxu0 0
        %1772 = vmatprep.subr.bf16.mxu0 0
        %1773 = vmatpush1.bf16.msra.mxu0 %v1754
        %1774 = vmatprep.subr.bf16.mxu0 0
        %1775 = vmatpush1.bf16.msra.mxu0 %v1753
        %1776 = vmatprep.subr.bf16.mxu0 0
        %1777 = vmatpush2.bf16.msra.mxu0 0
        %1778 = vmatprep.subr.bf16.mxu0 0
        %1779 = vmatpush2.bf16.msra.mxu0 0
        %1780 = vmatprep.subr.bf16.mxu0 0
        %1781 = vmatpush2.bf16.msra.mxu0 0
        %1782 = vmatprep.subr.bf16.mxu0 0
        %1783 = vmatpush2.bf16.msra.mxu0 0
        %1784 = vmatprep.subr.bf16.mxu0 0
        %1785 = vmatpush2.bf16.msra.mxu0 0
        %1786 = vmatprep.subr.bf16.mxu0 0
        %1787 = vmatpush2.bf16.msra.mxu0 0
        %1788 = vmatprep.subr.bf16.mxu0 0
        %1789 = vmatpush2.bf16.msra.mxu0 0
        %1790 = vmatprep.subr.bf16.mxu0 0
        %1791 = vmatpush2.bf16.msra.mxu0 0
        %1792 = vmatprep.mubr.bf16.mxu0 0
        %1793 = vmatmul.mubr.bf16.gmra.mxu0 %v1758
        %v1794 = vpop.f32.mrf.mxu0
        %v1795 = vadd.f32 %v1744, %v1794
        %v1796 = vpop.f32.mrf.mxu0
        %v1797 = vpop.f32.mrf.mxu0
        %v1798 = vadd.f32 %v1744, %v1797
        %v1799 = vpop.f32.mrf.mxu0
        %1800 = vdwg.mxu0
        %1801 = vst.msk [vmem:[%s691] sm:$0xff] %vm732, %v1795
        %1802 = vst.msk [vmem:[%s691 + $0x8] sm:$0xff] %vm732, %v1798
        %s1803 = sand.u32 %s516, 1
        %s1804 = scalar_lea.sflag [#allocation4], %s1803
        %s1805 = sand.u32 %s516, 1
        %s1806 = smul.addr %s1805, 16
        %s1807 = scalar_lea.vmem [#allocation3], %s1806
        // Predicated region
        $region109: #{tpu_custom_call.1} parent=107 // pred_check
          %p1808 = pneg %p526
        $region110: #{tpu_custom_call.1} parent=107 // pred_check_branch
          %1810 = sbr.rel (%p1808) target = $region112
        $region111: #{tpu_custom_call.1} parent=107 // pred_region
          %s1812 = ssub.s32 256, 256
          %1813 = vsyncadd %s1804, %s1812
          %s1814 = smul.addr %s36, 2
          %s1815 = smul.addr %s1814, 128
          %s1816 = scalar_lea.hbm %s22, %s1815
          %s1817 = sshll.u32 %s1807, 4
          %s1818 = int_to_ptr.vmem [resolvable:$true] %s1817
          %1823 = dma.vmem_to_hbm [thread:$0]  %s1818, 256, %s1816, %s1804, 128, 128, 8
        $region112: #{tpu_custom_call.1} parent=107 // pred_fallthru
          _
      $region108: #{tpu_custom_call.1} parent=5 // pred_fallthru
        _
      %p1824 = scmp.le.s32.totalorder 2, %s31
      // Predicated region
      $region113: #{tpu_custom_call.1} parent=5 // pred_check
        %p1825 = pneg %p1824
      $region114: #{tpu_custom_call.1} parent=5 // pred_check_branch
        %1827 = sbr.rel (%p1825) target = $region116
      $region115: #{tpu_custom_call.1} parent=5 // pred_region
        %s1828 = ssub.s32 %s31, 2
        // Predicated region
        $region117: #{tpu_custom_call.1} parent=115 // pred_check
          %p1829 = pneg %p532
        $region118: #{tpu_custom_call.1} parent=115 // pred_check_branch
          %1831 = sbr.rel (%p1829) target = $region120
        $region119: #{tpu_custom_call.1} parent=115 // pred_region
          %s1832 = sand.u32 %s517, 1
          %s1833 = scalar_lea.sflag [#allocation4], %s1832
          %s1834 = sand.u32 %s517, 1
          %s1835 = smul.addr %s1834, 16
          %s1836 = scalar_lea.vmem [#allocation3], %s1835
          %1837 = dma.done %s1833, 256
        $region120: #{tpu_custom_call.1} parent=115 // pred_fallthru
          _
      $region116: #{tpu_custom_call.1} parent=5 // pred_fallthru
        _
    $region6: #{tpu_custom_call.1} parent=1 // loop_footer
      %s35 = sadd.s32 1, %s31
    $region7: #{tpu_custom_call.1} parent=1 // loop_footer_branch
      %30 = sbr.rel target = $region3
    $region8: #{tpu_custom_call.1} parent=1 // loop_exit
      _
    %1838 = vsyncpa [#allocation4], 1
    %s1839 = scalar_lea.sflag [#allocation4], 1
    %1840 = vsyncpa %s1839, 1

</llo_original>
